<compile_context>
chip_gen: v7x
topology: tpu7x:2x2x1
jax: 0.10.0
libtpu: 0.0.40
codegen_flags: <defaults>
</compile_context>

<pallas_src>
import jax
import jax.numpy as jnp
from jax.experimental import pallas as pl
from jax.experimental.pallas import tpu as pltpu


def _round_up(n, m):
    return ((n + m - 1) // m) * m


def mlp_kernel(x_ref, w1_ref, b1_ref, w2_ref, b2_ref, w3_ref, b3_ref, o_ref):
    # Linear -> ReLU  (bf16 operands on the MXU, f32 accumulation + f32 elementwise)
    h1 = jnp.dot(x_ref[...], w1_ref[...], preferred_element_type=jnp.float32)
    h1 = jnp.maximum(h1 + b1_ref[...], 0.0)
    # Linear -> ReLU
    h2 = jnp.dot(h1.astype(jnp.bfloat16), w2_ref[...],
                 preferred_element_type=jnp.float32)
    h2 = jnp.maximum(h2 + b2_ref[...], 0.0)
    # Linear -> Sigmoid   (sigmoid/exp sits on the EUP slot, hidden under the matmuls)
    logits = jnp.dot(h2.astype(jnp.bfloat16), w3_ref[...],
                     preferred_element_type=jnp.float32)
    o_ref[...] = jax.nn.sigmoid(logits + b3_ref[...]).astype(o_ref.dtype)


def mlp_forward(x, w1, b1, w2, b2, w3, b3, *, block_b=128):
    """Forward pass of Linear->ReLU->Linear->ReLU->Linear->Sigmoid via one Pallas call.

    x: (B, in_size) f32.  w*: (in, out) f32.  b*: (1, out) f32.  Returns (B, out) f32.
    """
    B, in_size = x.shape
    hidden = w1.shape[1]
    out_size = w3.shape[1]

    # Lane-pad the first contraction dim and the output dim to multiples of 128
    # (zero padding is exact for the matmul); pad B up to a multiple of the row tile.
    k1p = _round_up(in_size, 128)
    np_ = _round_up(out_size, 128)
    tb = min(block_b, _round_up(B, 8))
    bp = _round_up(B, tb)

    x_p = jnp.zeros((bp, k1p), jnp.bfloat16).at[:B, :in_size].set(
        x.astype(jnp.bfloat16))
    w1_p = jnp.zeros((k1p, hidden), jnp.bfloat16).at[:in_size, :].set(
        w1.astype(jnp.bfloat16))
    w2_b = w2.astype(jnp.bfloat16)
    w3_p = jnp.zeros((hidden, np_), jnp.bfloat16).at[:, :out_size].set(
        w3.astype(jnp.bfloat16))
    b3_p = jnp.zeros((1, np_), jnp.float32).at[:, :out_size].set(b3)

    grid = (bp // tb,)

    out = pl.pallas_call(
        mlp_kernel,
        out_shape=jax.ShapeDtypeStruct((bp, np_), jnp.float32),
        grid=grid,
        in_specs=[
            # Streamed per-grid-step operand: one TB-row tile of x.
            pl.BlockSpec((tb, k1p), lambda i: (i, 0)),
            # Weights / biases: constant index_map -> loaded once, VMEM-resident.
            pl.BlockSpec((k1p, hidden), lambda i: (0, 0)),
            pl.BlockSpec((1, hidden), lambda i: (0, 0)),
            pl.BlockSpec((hidden, hidden), lambda i: (0, 0)),
            pl.BlockSpec((1, hidden), lambda i: (0, 0)),
            pl.BlockSpec((hidden, np_), lambda i: (0, 0)),
            pl.BlockSpec((1, np_), lambda i: (0, 0)),
        ],
        out_specs=pl.BlockSpec((tb, np_), lambda i: (i, 0)),
        compiler_params=pltpu.CompilerParams(
            dimension_semantics=("parallel",),
            vmem_limit_bytes=64 * 1024 * 1024,
        ),
    )(x_p, w1_p, b1, w2_b, b2, w3_p, b3_p)

    # Drop batch / lane padding outside the kernel.
    return out[:B, :out_size]


def init_linear(key, in_dim, out_dim):
    # Deterministic, PyTorch-like uniform(-1/sqrt(in), 1/sqrt(in)) init.
    kw, kb = jax.random.split(key)
    bound = 1.0 / jnp.sqrt(jnp.float32(in_dim))
    w = jax.random.uniform(kw, (in_dim, out_dim), jnp.float32, -bound, bound)
    b = jax.random.uniform(kb, (1, out_dim), jnp.float32, -bound, bound)
    return w, b


if __name__ == "__main__":
    # Small but grid-exercising shapes; hidden_size follows the module default (512).
    B, in_size, hidden_size, out_size = 512, 64, 512, 16

    key = jax.random.PRNGKey(0)
    kx, k1, k2, k3 = jax.random.split(key, 4)

    x = jax.random.normal(kx, (B, in_size), jnp.float32)
    w1, b1 = init_linear(k1, in_size, hidden_size)
    w2, b2 = init_linear(k2, hidden_size, hidden_size)
    w3, b3 = init_linear(k3, hidden_size, out_size)

    out = mlp_forward(x, w1, b1, w2, b2, w3, b3)
    out = jax.block_until_ready(out)
    assert out.shape == (B, out_size)

    # Reference in plain f32 JAX (same semantics as the PyTorch Sequential).
    h = jnp.maximum(x @ w1 + b1, 0.0)
    h = jnp.maximum(h @ w2 + b2, 0.0)
    ref = jax.nn.sigmoid(h @ w3 + b3)
    # Tolerance accounts for bf16 matmul operands (f32 accumulation); sigmoid output
    # is bounded in [0, 1] so absolute tolerance is meaningful.
    assert jnp.allclose(out, ref, atol=2e-2, rtol=0.0), float(
        jnp.max(jnp.abs(out - ref)))

    print("KERNEL_OK")
</pallas_src>

<mosaic_0001>
module attributes {stable_mosaic.version = 11 : i64} {
  func.func @mlp_kernel(%arg0: i32, %arg1: memref<128x128xbf16, #tpu.memory_space<vmem>>, %arg2: memref<128x512xbf16, #tpu.memory_space<vmem>>, %arg3: memref<1x512xf32, #tpu.memory_space<vmem>>, %arg4: memref<512x512xbf16, #tpu.memory_space<vmem>>, %arg5: memref<1x512xf32, #tpu.memory_space<vmem>>, %arg6: memref<512x128xbf16, #tpu.memory_space<vmem>>, %arg7: memref<1x128xf32, #tpu.memory_space<vmem>>, %arg8: memref<128x128xf32, #tpu.memory_space<vmem>>) attributes {dimension_semantics = [#tpu.dimension_semantics<parallel>], iteration_bounds = array<i64: 4>, scalar_prefetch = 0 : i64, scratch_operands = 0 : i64, tpu.core_type = #tpu.core_type<tc>, window_params = [{transform_indices = @transform_0, window_bounds = array<i64: 128, 128>}, {pipeline_mode = #tpu.pipeline_mode<synchronous>, transform_indices = @transform_1, window_bounds = array<i64: 128, 512>}, {pipeline_mode = #tpu.pipeline_mode<synchronous>, transform_indices = @transform_2, window_bounds = array<i64: 1, 512>}, {pipeline_mode = #tpu.pipeline_mode<synchronous>, transform_indices = @transform_3, window_bounds = array<i64: 512, 512>}, {pipeline_mode = #tpu.pipeline_mode<synchronous>, transform_indices = @transform_4, window_bounds = array<i64: 1, 512>}, {pipeline_mode = #tpu.pipeline_mode<synchronous>, transform_indices = @transform_5, window_bounds = array<i64: 512, 128>}, {pipeline_mode = #tpu.pipeline_mode<synchronous>, transform_indices = @transform_6, window_bounds = array<i64: 1, 128>}, {transform_indices = @transform_7, window_bounds = array<i64: 128, 128>}]} {
    %c0 = arith.constant 0 : index
    %c0_0 = arith.constant 0 : index
    %0 = vector.load %arg1[%c0, %c0_0] : memref<128x128xbf16, #tpu.memory_space<vmem>>, vector<128x128xbf16>
    %c0_1 = arith.constant 0 : index
    %c0_2 = arith.constant 0 : index
    %1 = vector.load %arg2[%c0_1, %c0_2] : memref<128x512xbf16, #tpu.memory_space<vmem>>, vector<128x512xbf16>
    %cst = arith.constant dense<0.000000e+00> : vector<128x512xf32>
    %2 = tpu.matmul %0, %1, %cst {dimension_numbers = #tpu.dot_dimension_numbers<[1], [0], [0], [1], [0, 0, 1, 1], [], []>} : vector<128x128xbf16>, vector<128x512xbf16>, vector<128x512xf32> -> vector<128x512xf32>
    %c0_3 = arith.constant 0 : index
    %c0_4 = arith.constant 0 : index
    %3 = vector.load %arg3[%c0_3, %c0_4] : memref<1x512xf32, #tpu.memory_space<vmem>>, vector<1x512xf32>
    %4 = vector.broadcast %3 : vector<1x512xf32> to vector<128x512xf32>
    %5 = arith.addf %2, %4 : vector<128x512xf32>
    %cst_5 = arith.constant 0.000000e+00 : f32
    %6 = vector.broadcast %cst_5 : f32 to vector<128x512xf32>
    %7 = arith.maximumf %5, %6 : vector<128x512xf32>
    %8 = arith.truncf %7 : vector<128x512xf32> to vector<128x512xbf16>
    %c0_6 = arith.constant 0 : index
    %c0_7 = arith.constant 0 : index
    %9 = vector.load %arg4[%c0_6, %c0_7] : memref<512x512xbf16, #tpu.memory_space<vmem>>, vector<512x512xbf16>
    %cst_8 = arith.constant dense<0.000000e+00> : vector<128x512xf32>
    %10 = tpu.matmul %8, %9, %cst_8 {dimension_numbers = #tpu.dot_dimension_numbers<[1], [0], [0], [1], [0, 0, 1, 1], [], []>} : vector<128x512xbf16>, vector<512x512xbf16>, vector<128x512xf32> -> vector<128x512xf32>
    %c0_9 = arith.constant 0 : index
    %c0_10 = arith.constant 0 : index
    %11 = vector.load %arg5[%c0_9, %c0_10] : memref<1x512xf32, #tpu.memory_space<vmem>>, vector<1x512xf32>
    %12 = vector.broadcast %11 : vector<1x512xf32> to vector<128x512xf32>
    %13 = arith.addf %10, %12 : vector<128x512xf32>
    %cst_11 = arith.constant 0.000000e+00 : f32
    %14 = vector.broadcast %cst_11 : f32 to vector<128x512xf32>
    %15 = arith.maximumf %13, %14 : vector<128x512xf32>
    %16 = arith.truncf %15 : vector<128x512xf32> to vector<128x512xbf16>
    %c0_12 = arith.constant 0 : index
    %c0_13 = arith.constant 0 : index
    %17 = vector.load %arg6[%c0_12, %c0_13] : memref<512x128xbf16, #tpu.memory_space<vmem>>, vector<512x128xbf16>
    %cst_14 = arith.constant dense<0.000000e+00> : vector<128x128xf32>
    %18 = tpu.matmul %16, %17, %cst_14 {dimension_numbers = #tpu.dot_dimension_numbers<[1], [0], [0], [1], [0, 0, 1, 1], [], []>} : vector<128x512xbf16>, vector<512x128xbf16>, vector<128x128xf32> -> vector<128x128xf32>
    %c0_15 = arith.constant 0 : index
    %c0_16 = arith.constant 0 : index
    %19 = vector.load %arg7[%c0_15, %c0_16] : memref<1x128xf32, #tpu.memory_space<vmem>>, vector<1x128xf32>
    %20 = vector.broadcast %19 : vector<1x128xf32> to vector<128x128xf32>
    %21 = arith.addf %18, %20 : vector<128x128xf32>
    %22 = arith.negf %21 : vector<128x128xf32>
    %23 = math.exp %22 : vector<128x128xf32>
    %cst_17 = arith.constant 1.000000e+00 : f32
    %24 = vector.broadcast %cst_17 : f32 to vector<128x128xf32>
    %25 = arith.addf %24, %23 : vector<128x128xf32>
    %26 = arith.divf %24, %25 : vector<128x128xf32>
    %c0_18 = arith.constant 0 : index
    %c0_19 = arith.constant 0 : index
    %27 = vector.load %arg8[%c0_18, %c0_19] : memref<128x128xf32, #tpu.memory_space<vmem>>, vector<128x128xf32>
    tpu.vector_store %arg8[%c0_18, %c0_19], %26 {strides = array<i32>} : memref<128x128xf32, #tpu.memory_space<vmem>>, vector<128x128xf32>,
    return
  }
  func.func @transform_0(%arg0: i32) -> (i32, i32) {
    %c0_i32 = arith.constant 0 : i32
    %c0_i32_0 = arith.constant 0 : i32
    return %arg0, %c0_i32 : i32, i32
  }
  func.func @transform_1(%arg0: i32) -> (i32, i32) {
    %c0_i32 = arith.constant 0 : i32
    %c0_i32_0 = arith.constant 0 : i32
    %c0_i32_1 = arith.constant 0 : i32
    return %c0_i32, %c0_i32_0 : i32, i32
  }
  func.func @transform_2(%arg0: i32) -> (i32, i32) {
    %c0_i32 = arith.constant 0 : i32
    %c0_i32_0 = arith.constant 0 : i32
    %c0_i32_1 = arith.constant 0 : i32
    return %c0_i32, %c0_i32_0 : i32, i32
  }
  func.func @transform_3(%arg0: i32) -> (i32, i32) {
    %c0_i32 = arith.constant 0 : i32
    %c0_i32_0 = arith.constant 0 : i32
    %c0_i32_1 = arith.constant 0 : i32
    return %c0_i32, %c0_i32_0 : i32, i32
  }
  func.func @transform_4(%arg0: i32) -> (i32, i32) {
    %c0_i32 = arith.constant 0 : i32
    %c0_i32_0 = arith.constant 0 : i32
    %c0_i32_1 = arith.constant 0 : i32
    return %c0_i32, %c0_i32_0 : i32, i32
  }
  func.func @transform_5(%arg0: i32) -> (i32, i32) {
    %c0_i32 = arith.constant 0 : i32
    %c0_i32_0 = arith.constant 0 : i32
    %c0_i32_1 = arith.constant 0 : i32
    return %c0_i32, %c0_i32_0 : i32, i32
  }
  func.func @transform_6(%arg0: i32) -> (i32, i32) {
    %c0_i32 = arith.constant 0 : i32
    %c0_i32_0 = arith.constant 0 : i32
    %c0_i32_1 = arith.constant 0 : i32
    return %c0_i32, %c0_i32_0 : i32, i32
  }
  func.func @transform_7(%arg0: i32) -> (i32, i32) {
    %c0_i32 = arith.constant 0 : i32
    %c0_i32_0 = arith.constant 0 : i32
    return %arg0, %c0_i32 : i32, i32
  }
}

</mosaic_0001>

<llo_original>
// kernel: tpu_custom_call.1
$region0: #{tpu_custom_call.1}
  #allocation0 [shape = 'u32[]', space=smem, size = 0x4, offset = 0x4, fixed_abs, tag = 'smem constant byte address 0x4 - core index']
  #allocation1 [shape = 'u32[144,128]{1,0:T(1,128)}', space=vmem, size = 0x12000, scoped, tag = 'internal scratch']
  %s0 = inlined_call_operand.hbm [shape: bf16[512,128], index: 0, kind: input, shape index: {}]
  %s1 = inlined_call_operand.hbm [shape: bf16[128,512], index: 1, kind: input, shape index: {}]
  %s2 = inlined_call_operand.hbm [shape: f32[1,512], index: 2, kind: input, shape index: {}]
  %s3 = inlined_call_operand.hbm [shape: bf16[512,512], index: 3, kind: input, shape index: {}]
  %s4 = inlined_call_operand.hbm [shape: f32[1,512], index: 4, kind: input, shape index: {}]
  %s5 = inlined_call_operand.hbm [shape: bf16[512,128], index: 5, kind: input, shape index: {}]
  %s6 = inlined_call_operand.hbm [shape: f32[1,128], index: 6, kind: input, shape index: {}]
  %s7 = inlined_call_operand.hbm [shape: f32[512,128], index: 7, kind: output, shape index: {}]
  %s8 = sld [smem:[#allocation0]]
  $region89: #{tpu_custom_call.1} parent=0
    _
  %s10 = ssub.s32 1, %s8
  %s11 = scalar_select 0, %s10, %s8
  $region1: #{tpu_custom_call.1} parent=0
    #allocation2 [shape = 'u8[65536]{0}', space=vmem, size = 0x10000, scoped, tag = 'input window, operand 0']
    #allocation3 [shape = 's32[2]{0}', space=sflag, size = 0x8, scoped, tag = 'scoped memory for tpu_custom_call.1']
    #allocation4 [shape = 's32[2]{0}', space=sflag, size = 0x8, scoped, tag = 'scoped memory for tpu_custom_call.1']
    #allocation5 [shape = 'u8[131072]{0}', space=vmem, size = 0x20000, scoped, tag = 'input window, operand 1, single buffered']
    #allocation6 [shape = 's32[1]{0}', space=sflag, size = 0x4, scoped, tag = 'scoped memory for tpu_custom_call.1']
    #allocation7 [shape = 'u8[2048]{0}', space=vmem, size = 0x800, scoped, tag = 'input window, operand 2, single buffered']
    #allocation8 [shape = 'u8[524288]{0}', space=vmem, size = 0x80000, scoped, tag = 'input window, operand 3, single buffered']
    #allocation9 [shape = 's32[1]{0}', space=sflag, size = 0x4, scoped, tag = 'scoped memory for tpu_custom_call.1']
    #allocation10 [shape = 'u8[2048]{0}', space=vmem, size = 0x800, scoped, tag = 'input window, operand 4, single buffered']
    #allocation11 [shape = 'u8[131072]{0}', space=vmem, size = 0x20000, scoped, tag = 'input window, operand 5, single buffered']
    #allocation12 [shape = 's32[1]{0}', space=sflag, size = 0x4, scoped, tag = 'scoped memory for tpu_custom_call.1']
    #allocation13 [shape = 'u8[512]{0}', space=vmem, size = 0x400, scoped, tag = 'input window, operand 6, single buffered']
    #allocation14 [shape = 'u8[131072]{0}', space=vmem, size = 0x20000, scoped, tag = 'output window, operand 0']
    %12 = vsyncpa [#allocation3], 0
    %s13 = scalar_lea.sflag [#allocation3], 1
    %14 = vsyncpa %s13, 0
    %15 = vsyncpa [#allocation6], 0
    %16 = vsyncpa [#allocation9], 0
    %17 = vsyncpa [#allocation12], 0
    %18 = vsyncpa [#allocation4], 0
    %s19 = scalar_lea.sflag [#allocation4], 1
    %20 = vsyncpa %s19, 0
    loop: start=0, step=1, limit=6
    $region2: #{tpu_custom_call.1} parent=1 // loop_pre_header
      _
    $region3: #{tpu_custom_call.1} parent=1 // loop_header
      %s22 = sphi 0, %s26
      %p23 = scmp.ge.s32.totalorder %s22, 6
      %s32 = sphi 0, %s34
      %s35 = sphi 0, %s32
      %s36 = sphi 0, %s35
      %s52 = sphi 0, %s36
      %s56 = sphi 0, %s56
      %s58 = sphi 0, %s56
      %s59 = sphi 0, %s58
      %s73 = sphi 0, %s59
      %s77 = sphi 0, %s77
      %s79 = sphi 0, %s77
      %s80 = sphi 0, %s79
      %s94 = sphi 0, %s80
      %s98 = sphi 0, %s98
      %s100 = sphi 0, %s98
      %s101 = sphi 0, %s100
      %s115 = sphi 0, %s101
      %s119 = sphi 0, %s119
      %s121 = sphi 0, %s119
      %s122 = sphi 0, %s121
      %s136 = sphi 0, %s122
      %s140 = sphi 0, %s140
      %s142 = sphi 0, %s140
      %s143 = sphi 0, %s142
      %s157 = sphi 0, %s143
      %s161 = sphi 0, %s161
      %s163 = sphi 0, %s161
      %s164 = sphi 0, %s163
      %s178 = sphi 0, %s164
      %s184 = sphi 0, %s186
      %s187 = sphi 0, %s184
      %s188 = sphi 0, %s187
      %s204 = sphi 0, %s188
    $region4: #{tpu_custom_call.1} parent=1 // loop_header_branch
      %25 = sbr.rel (%p23) target = $region8
    $region5: #{tpu_custom_call.1} parent=1 // loop_body
      %s27 = ssub.s32 %s22, 1
      %s28 = ssub.s32 %s22, 2
      %s29 = sadd.s32 %s22, 1
      %s30 = ssub.s32 %s22, %s29
      %p31 = scmp.eq.s32.totalorder %s30, 0
      %s33 = sadd.s32 %s32, 1
      %s34 = scalar_select %p31, %s32, %s33
      %p37 = pneg %p31
      %p38 = scmp.eq.s32.totalorder %s22, 3
      %p39 = por %p37, %p38
      %p40 = scmp.ne.s32.totalorder %s32, %s35
      %p41 = scmp.eq.s32.totalorder %s22, 0
      %p42 = por %p40, %p41
      %p43 = scmp.ne.s32.totalorder %s32, %s35
      %p44 = scmp.eq.s32.totalorder %s27, 3
      %p45 = por %p43, %p44
      %p46 = scmp.ne.s32.totalorder %s35, %s36
      %p47 = scmp.eq.s32.totalorder %s27, 0
      %p48 = por %p46, %p47
      %p49 = scmp.ne.s32.totalorder %s35, %s36
      %p50 = scmp.eq.s32.totalorder %s28, 3
      %p51 = por %p49, %p50
      %p53 = scmp.ne.s32.totalorder %s36, %s52
      %p54 = scmp.eq.s32.totalorder %s28, 0
      %p55 = por %p53, %p54
      %s57 = sadd.s32 %s56, 1
      %p60 = scmp.eq.s32.totalorder %s22, 3
      %p61 = scmp.ne.s32.totalorder %s56, %s58
      %p62 = scmp.eq.s32.totalorder %s22, 0
      %p63 = por %p61, %p62
      %p64 = scmp.ne.s32.totalorder %s56, %s58
      %p65 = scmp.eq.s32.totalorder %s27, 3
      %p66 = por %p64, %p65
      %p67 = scmp.ne.s32.totalorder %s58, %s59
      %p68 = scmp.eq.s32.totalorder %s27, 0
      %p69 = por %p67, %p68
      %p70 = scmp.ne.s32.totalorder %s58, %s59
      %p71 = scmp.eq.s32.totalorder %s28, 3
      %p72 = por %p70, %p71
      %p74 = scmp.ne.s32.totalorder %s59, %s73
      %p75 = scmp.eq.s32.totalorder %s28, 0
      %p76 = por %p74, %p75
      %s78 = sadd.s32 %s77, 1
      %p81 = scmp.eq.s32.totalorder %s22, 3
      %p82 = scmp.ne.s32.totalorder %s77, %s79
      %p83 = scmp.eq.s32.totalorder %s22, 0
      %p84 = por %p82, %p83
      %p85 = scmp.ne.s32.totalorder %s77, %s79
      %p86 = scmp.eq.s32.totalorder %s27, 3
      %p87 = por %p85, %p86
      %p88 = scmp.ne.s32.totalorder %s79, %s80
      %p89 = scmp.eq.s32.totalorder %s27, 0
      %p90 = por %p88, %p89
      %p91 = scmp.ne.s32.totalorder %s79, %s80
      %p92 = scmp.eq.s32.totalorder %s28, 3
      %p93 = por %p91, %p92
      %p95 = scmp.ne.s32.totalorder %s80, %s94
      %p96 = scmp.eq.s32.totalorder %s28, 0
      %p97 = por %p95, %p96
      %s99 = sadd.s32 %s98, 1
      %p102 = scmp.eq.s32.totalorder %s22, 3
      %p103 = scmp.ne.s32.totalorder %s98, %s100
      %p104 = scmp.eq.s32.totalorder %s22, 0
      %p105 = por %p103, %p104
      %p106 = scmp.ne.s32.totalorder %s98, %s100
      %p107 = scmp.eq.s32.totalorder %s27, 3
      %p108 = por %p106, %p107
      %p109 = scmp.ne.s32.totalorder %s100, %s101
      %p110 = scmp.eq.s32.totalorder %s27, 0
      %p111 = por %p109, %p110
      %p112 = scmp.ne.s32.totalorder %s100, %s101
      %p113 = scmp.eq.s32.totalorder %s28, 3
      %p114 = por %p112, %p113
      %p116 = scmp.ne.s32.totalorder %s101, %s115
      %p117 = scmp.eq.s32.totalorder %s28, 0
      %p118 = por %p116, %p117
      %s120 = sadd.s32 %s119, 1
      %p123 = scmp.eq.s32.totalorder %s22, 3
      %p124 = scmp.ne.s32.totalorder %s119, %s121
      %p125 = scmp.eq.s32.totalorder %s22, 0
      %p126 = por %p124, %p125
      %p127 = scmp.ne.s32.totalorder %s119, %s121
      %p128 = scmp.eq.s32.totalorder %s27, 3
      %p129 = por %p127, %p128
      %p130 = scmp.ne.s32.totalorder %s121, %s122
      %p131 = scmp.eq.s32.totalorder %s27, 0
      %p132 = por %p130, %p131
      %p133 = scmp.ne.s32.totalorder %s121, %s122
      %p134 = scmp.eq.s32.totalorder %s28, 3
      %p135 = por %p133, %p134
      %p137 = scmp.ne.s32.totalorder %s122, %s136
      %p138 = scmp.eq.s32.totalorder %s28, 0
      %p139 = por %p137, %p138
      %s141 = sadd.s32 %s140, 1
      %p144 = scmp.eq.s32.totalorder %s22, 3
      %p145 = scmp.ne.s32.totalorder %s140, %s142
      %p146 = scmp.eq.s32.totalorder %s22, 0
      %p147 = por %p145, %p146
      %p148 = scmp.ne.s32.totalorder %s140, %s142
      %p149 = scmp.eq.s32.totalorder %s27, 3
      %p150 = por %p148, %p149
      %p151 = scmp.ne.s32.totalorder %s142, %s143
      %p152 = scmp.eq.s32.totalorder %s27, 0
      %p153 = por %p151, %p152
      %p154 = scmp.ne.s32.totalorder %s142, %s143
      %p155 = scmp.eq.s32.totalorder %s28, 3
      %p156 = por %p154, %p155
      %p158 = scmp.ne.s32.totalorder %s143, %s157
      %p159 = scmp.eq.s32.totalorder %s28, 0
      %p160 = por %p158, %p159
      %s162 = sadd.s32 %s161, 1
      %p165 = scmp.eq.s32.totalorder %s22, 3
      %p166 = scmp.ne.s32.totalorder %s161, %s163
      %p167 = scmp.eq.s32.totalorder %s22, 0
      %p168 = por %p166, %p167
      %p169 = scmp.ne.s32.totalorder %s161, %s163
      %p170 = scmp.eq.s32.totalorder %s27, 3
      %p171 = por %p169, %p170
      %p172 = scmp.ne.s32.totalorder %s163, %s164
      %p173 = scmp.eq.s32.totalorder %s27, 0
      %p174 = por %p172, %p173
      %p175 = scmp.ne.s32.totalorder %s163, %s164
      %p176 = scmp.eq.s32.totalorder %s28, 3
      %p177 = por %p175, %p176
      %p179 = scmp.ne.s32.totalorder %s164, %s178
      %p180 = scmp.eq.s32.totalorder %s28, 0
      %p181 = por %p179, %p180
      %s182 = ssub.s32 %s22, %s29
      %p183 = scmp.eq.s32.totalorder %s182, 0
      %s185 = sadd.s32 %s184, 1
      %s186 = scalar_select %p183, %s184, %s185
      %p189 = pneg %p183
      %p190 = scmp.eq.s32.totalorder %s22, 3
      %p191 = por %p189, %p190
      %p192 = scmp.ne.s32.totalorder %s184, %s187
      %p193 = scmp.eq.s32.totalorder %s22, 0
      %p194 = por %p192, %p193
      %p195 = scmp.ne.s32.totalorder %s184, %s187
      %p196 = scmp.eq.s32.totalorder %s27, 3
      %p197 = por %p195, %p196
      %p198 = scmp.ne.s32.totalorder %s187, %s188
      %p199 = scmp.eq.s32.totalorder %s27, 0
      %p200 = por %p198, %p199
      %p201 = scmp.ne.s32.totalorder %s187, %s188
      %p202 = scmp.eq.s32.totalorder %s28, 3
      %p203 = por %p201, %p202
      %p205 = scmp.ne.s32.totalorder %s188, %s204
      %p206 = scmp.eq.s32.totalorder %s28, 0
      %p207 = por %p205, %p206
      %p208 = scmp.le.s32.totalorder 1, %s22
      %p209 = scmp.lt.s32.totalorder %s22, 5
      %p210 = pnand %p208, %p209
      %p211 = pneg %p210
      // Predicated region
      $region9: #{tpu_custom_call.1} parent=5 // pred_check
        _
      $region10: #{tpu_custom_call.1} parent=5 // pred_check_branch
        %213 = sbr.rel (%p210) target = $region12
      $region11: #{tpu_custom_call.1} parent=5 // pred_region
        %s214 = ssub.s32 %s22, 1
        // Predicated region
        $region13: #{tpu_custom_call.1} parent=11 // pred_check
          %p215 = pneg %p69
        $region14: #{tpu_custom_call.1} parent=11 // pred_check_branch
          %217 = sbr.rel (%p215) target = $region16
        $region15: #{tpu_custom_call.1} parent=11 // pred_region
          %s219 = ssub.s32 4096, 4096
          %220 = vsyncadd [#allocation6], %s219
          %s221 = sshll.u32 [#allocation5], 4
          %s222 = int_to_ptr.vmem [resolvable:$true] %s221
          %227 = dma.hbm_to_vmem [thread:$0]  %s1, 4096, %s222, [#allocation6], 256, 256, 16
        $region16: #{tpu_custom_call.1} parent=11 // pred_fallthru
          _
        // Predicated region
        $region17: #{tpu_custom_call.1} parent=11 // pred_check
          %p228 = pneg %p90
        $region18: #{tpu_custom_call.1} parent=11 // pred_check_branch
          %230 = sbr.rel (%p228) target = $region20
        $region19: #{tpu_custom_call.1} parent=11 // pred_region
          %s232 = ssub.s32 64, 64
          %233 = vsyncadd [#allocation6], %s232
          %s235 = sshll.u32 [#allocation7], 4
          %s236 = int_to_ptr.vmem [resolvable:$true] %s235
          %238 = dma.hbm_to_vmem [thread:$0]  %s2, 64, %s236, [#allocation6]
        $region20: #{tpu_custom_call.1} parent=11 // pred_fallthru
          _
        // Predicated region
        $region21: #{tpu_custom_call.1} parent=11 // pred_check
          %p239 = pneg %p111
        $region22: #{tpu_custom_call.1} parent=11 // pred_check_branch
          %241 = sbr.rel (%p239) target = $region24
        $region23: #{tpu_custom_call.1} parent=11 // pred_region
          %s243 = ssub.s32 16384, 16384
          %244 = vsyncadd [#allocation9], %s243
          %s245 = sshll.u32 [#allocation8], 4
          %s246 = int_to_ptr.vmem [resolvable:$true] %s245
          %251 = dma.hbm_to_vmem [thread:$0]  %s3, 16384, %s246, [#allocation9], 256, 256, 16
        $region24: #{tpu_custom_call.1} parent=11 // pred_fallthru
          _
        // Predicated region
        $region25: #{tpu_custom_call.1} parent=11 // pred_check
          %p252 = pneg %p132
        $region26: #{tpu_custom_call.1} parent=11 // pred_check_branch
          %254 = sbr.rel (%p252) target = $region28
        $region27: #{tpu_custom_call.1} parent=11 // pred_region
          %s256 = ssub.s32 64, 64
          %257 = vsyncadd [#allocation9], %s256
          %s259 = sshll.u32 [#allocation10], 4
          %s260 = int_to_ptr.vmem [resolvable:$true] %s259
          %262 = dma.hbm_to_vmem [thread:$0]  %s4, 64, %s260, [#allocation9]
        $region28: #{tpu_custom_call.1} parent=11 // pred_fallthru
          _
        // Predicated region
        $region29: #{tpu_custom_call.1} parent=11 // pred_check
          %p263 = pneg %p153
        $region30: #{tpu_custom_call.1} parent=11 // pred_check_branch
          %265 = sbr.rel (%p263) target = $region32
        $region31: #{tpu_custom_call.1} parent=11 // pred_region
          %s267 = ssub.s32 4096, 4096
          %268 = vsyncadd [#allocation12], %s267
          %s269 = sshll.u32 [#allocation11], 4
          %s270 = int_to_ptr.vmem [resolvable:$true] %s269
          %275 = dma.hbm_to_vmem [thread:$0]  %s5, 4096, %s270, [#allocation12], 64, 64, 4
        $region32: #{tpu_custom_call.1} parent=11 // pred_fallthru
          _
        // Predicated region
        $region33: #{tpu_custom_call.1} parent=11 // pred_check
          %p276 = pneg %p174
        $region34: #{tpu_custom_call.1} parent=11 // pred_check_branch
          %278 = sbr.rel (%p276) target = $region36
        $region35: #{tpu_custom_call.1} parent=11 // pred_region
          %s280 = ssub.s32 16, 16
          %281 = vsyncadd [#allocation12], %s280
          %s283 = sshll.u32 [#allocation13], 4
          %s284 = int_to_ptr.vmem [resolvable:$true] %s283
          %286 = dma.hbm_to_vmem [thread:$0]  %s6, 16, %s284, [#allocation12]
        $region36: #{tpu_custom_call.1} parent=11 // pred_fallthru
          _
      $region12: #{tpu_custom_call.1} parent=5 // pred_fallthru
        _
      %p287 = scmp.lt.s32.totalorder %s22, 4
      // Predicated region
      $region37: #{tpu_custom_call.1} parent=5 // pred_check
        %p288 = pneg %p287
      $region38: #{tpu_custom_call.1} parent=5 // pred_check_branch
        %290 = sbr.rel (%p288) target = $region40
      $region39: #{tpu_custom_call.1} parent=5 // pred_region
        // Predicated region
        $region41: #{tpu_custom_call.1} parent=39 // pred_check
          %p291 = pneg %p42
        $region42: #{tpu_custom_call.1} parent=39 // pred_check_branch
          %293 = sbr.rel (%p291) target = $region44
        $region43: #{tpu_custom_call.1} parent=39 // pred_region
          %s294 = sand.u32 %s32, 1
          %s295 = scalar_lea.sflag [#allocation3], %s294
          %s296 = sand.u32 %s32, 1
          %s297 = smul.addr %s296, 64
          %s298 = scalar_lea.vmem [#allocation2], %s297
          %s299 = smul.u32 16, %s22
          %s301 = ssub.s32 1024, 1024
          %302 = vsyncadd %s295, %s301
          %s303 = smul.addr %s299, 64
          %s304 = scalar_lea.hbm %s0, %s303
          %s305 = sshll.u32 %s298, 4
          %s306 = int_to_ptr.vmem [resolvable:$true] %s305
          %311 = dma.hbm_to_vmem [thread:$0]  %s304, 1024, %s306, %s295, 64, 64, 4
        $region44: #{tpu_custom_call.1} parent=39 // pred_fallthru
          _
      $region40: #{tpu_custom_call.1} parent=5 // pred_fallthru
        _
      %p312 = scmp.le.s32.totalorder 1, %s22
      %p313 = scmp.lt.s32.totalorder %s22, 5
      %p314 = pnand %p312, %p313
      %p315 = pneg %p314
      // Predicated region
      $region45: #{tpu_custom_call.1} parent=5 // pred_check
        _
      $region46: #{tpu_custom_call.1} parent=5 // pred_check_branch
        %317 = sbr.rel (%p314) target = $region48
      $region47: #{tpu_custom_call.1} parent=5 // pred_region
        %s318 = ssub.s32 %s22, 1
        %s319 = sand.u32 %s35, 1
        %s320 = scalar_lea.sflag [#allocation3], %s319
        %s321 = sand.u32 %s35, 1
        %s322 = smul.addr %s321, 64
        %s323 = scalar_lea.vmem [#allocation2], %s322
        // Predicated region
        $region49: #{tpu_custom_call.1} parent=47 // pred_check
          %p324 = pneg %p48
        $region50: #{tpu_custom_call.1} parent=47 // pred_check_branch
          %326 = sbr.rel (%p324) target = $region52
        $region51: #{tpu_custom_call.1} parent=47 // pred_region
          %327 = dma.done %s320, 1024
        $region52: #{tpu_custom_call.1} parent=47 // pred_fallthru
          _
        // Predicated region
        $region53: #{tpu_custom_call.1} parent=47 // pred_check
          %p328 = pneg %p69
        $region54: #{tpu_custom_call.1} parent=47 // pred_check_branch
          %330 = sbr.rel (%p328) target = $region56
        $region55: #{tpu_custom_call.1} parent=47 // pred_region
          %331 = dma.done [#allocation6], 4096
        $region56: #{tpu_custom_call.1} parent=47 // pred_fallthru
          _
        // Predicated region
        $region57: #{tpu_custom_call.1} parent=47 // pred_check
          %p332 = pneg %p90
        $region58: #{tpu_custom_call.1} parent=47 // pred_check_branch
          %334 = sbr.rel (%p332) target = $region60
        $region59: #{tpu_custom_call.1} parent=47 // pred_region
          %335 = dma.done [#allocation6], 64
        $region60: #{tpu_custom_call.1} parent=47 // pred_fallthru
          _
        // Predicated region
        $region61: #{tpu_custom_call.1} parent=47 // pred_check
          %p336 = pneg %p111
        $region62: #{tpu_custom_call.1} parent=47 // pred_check_branch
          %338 = sbr.rel (%p336) target = $region64
        $region63: #{tpu_custom_call.1} parent=47 // pred_region
          %339 = dma.done [#allocation9], 16384
        $region64: #{tpu_custom_call.1} parent=47 // pred_fallthru
          _
        // Predicated region
        $region65: #{tpu_custom_call.1} parent=47 // pred_check
          %p340 = pneg %p132
        $region66: #{tpu_custom_call.1} parent=47 // pred_check_branch
          %342 = sbr.rel (%p340) target = $region68
        $region67: #{tpu_custom_call.1} parent=47 // pred_region
          %343 = dma.done [#allocation9], 64
        $region68: #{tpu_custom_call.1} parent=47 // pred_fallthru
          _
        // Predicated region
        $region69: #{tpu_custom_call.1} parent=47 // pred_check
          %p344 = pneg %p153
        $region70: #{tpu_custom_call.1} parent=47 // pred_check_branch
          %346 = sbr.rel (%p344) target = $region72
        $region71: #{tpu_custom_call.1} parent=47 // pred_region
          %347 = dma.done [#allocation12], 4096
        $region72: #{tpu_custom_call.1} parent=47 // pred_fallthru
          _
        // Predicated region
        $region73: #{tpu_custom_call.1} parent=47 // pred_check
          %p348 = pneg %p174
        $region74: #{tpu_custom_call.1} parent=47 // pred_check_branch
          %350 = sbr.rel (%p348) target = $region76
        $region75: #{tpu_custom_call.1} parent=47 // pred_region
          %351 = dma.done [#allocation12], 16
        $region76: #{tpu_custom_call.1} parent=47 // pred_fallthru
          _
        %s352 = sand.u32 %s35, 1
        %s353 = scalar_lea.sflag [#allocation3], %s352
        %s354 = sand.u32 %s35, 1
        %s355 = smul.addr %s354, 64
        %s356 = scalar_lea.vmem [#allocation2], %s355
        %p357 = pneg %p48
        %p358 = pneg %p45
        %p359 = pneg %p69
        %p360 = pneg %p66
        %p361 = pneg %p90
        %p362 = pneg %p87
        %p363 = pneg %p111
        %p364 = pneg %p108
        %p365 = pneg %p132
        %p366 = pneg %p129
        %p367 = pneg %p153
        %p368 = pneg %p150
        %p369 = pneg %p174
        %p370 = pneg %p171
        %p371 = pneg %p200
        %p372 = pneg %p197
        %s373 = sand.u32 %s187, 1
        %s374 = scalar_lea.sflag [#allocation4], %s373
        %s375 = sand.u32 %s187, 1
        %s376 = smul.addr %s375, 128
        %s377 = scalar_lea.vmem [#allocation14], %s376
        %s378 = smul.u32 16, %s27
        %s379 = smul.u32 16, %s27
        %v381 = vld [vmem:[%s323] sm:$0xf]
        %v382 = vld [vmem:[%s323 + $0x4] sm:$0xf]
        %v383 = vld [vmem:[%s323 + $0x8] sm:$0xf]
        %v384 = vld [vmem:[%s323 + $0xc] sm:$0xf]
        %v385 = vld [vmem:[%s323 + $0x10] sm:$0xf]
        %v386 = vld [vmem:[%s323 + $0x14] sm:$0xf]
        %v387 = vld [vmem:[%s323 + $0x18] sm:$0xf]
        %v388 = vld [vmem:[%s323 + $0x1c] sm:$0xf]
        %v389 = vld [vmem:[%s323 + $0x20] sm:$0xf]
        %v390 = vld [vmem:[%s323 + $0x24] sm:$0xf]
        %v391 = vld [vmem:[%s323 + $0x28] sm:$0xf]
        %v392 = vld [vmem:[%s323 + $0x2c] sm:$0xf]
        %v393 = vld [vmem:[%s323 + $0x30] sm:$0xf]
        %v394 = vld [vmem:[%s323 + $0x34] sm:$0xf]
        %v395 = vld [vmem:[%s323 + $0x38] sm:$0xf]
        %v396 = vld [vmem:[%s323 + $0x3c] sm:$0xf]
        %v397 = vld [vmem:[#allocation5] sm:$0xff]
        %v398 = vld [vmem:[#allocation5 + $0x8] sm:$0xff]
        %v399 = vld [vmem:[#allocation5 + $0x10] sm:$0xff]
        %v400 = vld [vmem:[#allocation5 + $0x18] sm:$0xff]
        %v401 = vld [vmem:[#allocation5 + $0x20] sm:$0xff]
        %v402 = vld [vmem:[#allocation5 + $0x28] sm:$0xff]
        %v403 = vld [vmem:[#allocation5 + $0x30] sm:$0xff]
        %v404 = vld [vmem:[#allocation5 + $0x38] sm:$0xff]
        %v405 = vld [vmem:[#allocation5 + $0x40] sm:$0xff]
        %v406 = vld [vmem:[#allocation5 + $0x48] sm:$0xff]
        %v407 = vld [vmem:[#allocation5 + $0x50] sm:$0xff]
        %v408 = vld [vmem:[#allocation5 + $0x58] sm:$0xff]
        %v409 = vld [vmem:[#allocation5 + $0x60] sm:$0xff]
        %v410 = vld [vmem:[#allocation5 + $0x68] sm:$0xff]
        %v411 = vld [vmem:[#allocation5 + $0x70] sm:$0xff]
        %v412 = vld [vmem:[#allocation5 + $0x78] sm:$0xff]
        %v413 = vld [vmem:[#allocation5 + $0x80] sm:$0xff]
        %v414 = vld [vmem:[#allocation5 + $0x88] sm:$0xff]
        %v415 = vld [vmem:[#allocation5 + $0x90] sm:$0xff]
        %v416 = vld [vmem:[#allocation5 + $0x98] sm:$0xff]
        %v417 = vld [vmem:[#allocation5 + $0xa0] sm:$0xff]
        %v418 = vld [vmem:[#allocation5 + $0xa8] sm:$0xff]
        %v419 = vld [vmem:[#allocation5 + $0xb0] sm:$0xff]
        %v420 = vld [vmem:[#allocation5 + $0xb8] sm:$0xff]
        %v421 = vld [vmem:[#allocation5 + $0xc0] sm:$0xff]
        %v422 = vld [vmem:[#allocation5 + $0xc8] sm:$0xff]
        %v423 = vld [vmem:[#allocation5 + $0xd0] sm:$0xff]
        %v424 = vld [vmem:[#allocation5 + $0xd8] sm:$0xff]
        %v425 = vld [vmem:[#allocation5 + $0xe0] sm:$0xff]
        %v426 = vld [vmem:[#allocation5 + $0xe8] sm:$0xff]
        %v427 = vld [vmem:[#allocation5 + $0xf0] sm:$0xff]
        %v428 = vld [vmem:[#allocation5 + $0xf8] sm:$0xff]
        %v429 = vld [vmem:[#allocation7] sm:$0xf]
        %v431 = vlaneseq
        %v432 = vshrl.u32 %v431, 7
        %v433 = vsub.s32 0, %v432
        %v434 = vrot.slane %v429, %v433
        %v435 = vlaneseq
        %v436 = vshrl.u32 %v435, 7
        %v437 = vsub.s32 1, %v436
        %v438 = vrot.slane %v429, %v437
        %v439 = vlaneseq
        %v440 = vshrl.u32 %v439, 7
        %v441 = vsub.s32 2, %v440
        %v442 = vrot.slane %v429, %v441
        %v443 = vlaneseq
        %v444 = vshrl.u32 %v443, 7
        %v445 = vsub.s32 3, %v444
        %v446 = vrot.slane %v429, %v445
        %v467 = vunpack.c.l.b16 %v381
        %v468 = vunpack.c.l.b16 %v382
        %v469 = vunpack.c.l.b16 %v383
        %v470 = vunpack.c.l.b16 %v384
        %v471 = vunpack.c.l.b16 %v385
        %v472 = vunpack.c.l.b16 %v386
        %v473 = vunpack.c.l.b16 %v387
        %v474 = vunpack.c.l.b16 %v388
        %v475 = vunpack.c.l.b16 %v389
        %v476 = vunpack.c.l.b16 %v390
        %v477 = vunpack.c.l.b16 %v391
        %v478 = vunpack.c.l.b16 %v392
        %v479 = vunpack.c.l.b16 %v393
        %v480 = vunpack.c.l.b16 %v394
        %v481 = vunpack.c.l.b16 %v395
        %v482 = vunpack.c.l.b16 %v396
        %v483 = vpack.c.b16 %v468, %v467
        %v484 = vpack.c.b16 %v470, %v469
        %v485 = vpack.c.b16 %v472, %v471
        %v486 = vpack.c.b16 %v474, %v473
        %v487 = vpack.c.b16 %v476, %v475
        %v488 = vpack.c.b16 %v478, %v477
        %v489 = vpack.c.b16 %v480, %v479
        %v490 = vpack.c.b16 %v482, %v481
        %v531 = vunpack.c.l.b16 %v397
        %v532 = vunpack.c.h.b16 %v397
        %v533 = vunpack.c.l.b16 %v398
        %v534 = vunpack.c.h.b16 %v398
        %v535 = vunpack.c.l.b16 %v399
        %v536 = vunpack.c.h.b16 %v399
        %v537 = vunpack.c.l.b16 %v400
        %v538 = vunpack.c.h.b16 %v400
        %v539 = vunpack.c.l.b16 %v401
        %v540 = vunpack.c.h.b16 %v401
        %v541 = vunpack.c.l.b16 %v402
        %v542 = vunpack.c.h.b16 %v402
        %v543 = vunpack.c.l.b16 %v403
        %v544 = vunpack.c.h.b16 %v403
        %v545 = vunpack.c.l.b16 %v404
        %v546 = vunpack.c.h.b16 %v404
        %v547 = vunpack.c.l.b16 %v405
        %v548 = vunpack.c.h.b16 %v405
        %v549 = vunpack.c.l.b16 %v406
        %v550 = vunpack.c.h.b16 %v406
        %v551 = vunpack.c.l.b16 %v407
        %v552 = vunpack.c.h.b16 %v407
        %v553 = vunpack.c.l.b16 %v408
        %v554 = vunpack.c.h.b16 %v408
        %v555 = vunpack.c.l.b16 %v409
        %v556 = vunpack.c.h.b16 %v409
        %v557 = vunpack.c.l.b16 %v410
        %v558 = vunpack.c.h.b16 %v410
        %v559 = vunpack.c.l.b16 %v411
        %v560 = vunpack.c.h.b16 %v411
        %v561 = vunpack.c.l.b16 %v412
        %v562 = vunpack.c.h.b16 %v412
        %v563 = vunpack.c.l.b16 %v413
        %v564 = vunpack.c.h.b16 %v413
        %v565 = vunpack.c.l.b16 %v414
        %v566 = vunpack.c.h.b16 %v414
        %v567 = vunpack.c.l.b16 %v415
        %v568 = vunpack.c.h.b16 %v415
        %v569 = vunpack.c.l.b16 %v416
        %v570 = vunpack.c.h.b16 %v416
        %v571 = vunpack.c.l.b16 %v417
        %v572 = vunpack.c.h.b16 %v417
        %v573 = vunpack.c.l.b16 %v418
        %v574 = vunpack.c.h.b16 %v418
        %v575 = vunpack.c.l.b16 %v419
        %v576 = vunpack.c.h.b16 %v419
        %v577 = vunpack.c.l.b16 %v420
        %v578 = vunpack.c.h.b16 %v420
        %v579 = vunpack.c.l.b16 %v421
        %v580 = vunpack.c.h.b16 %v421
        %v581 = vunpack.c.l.b16 %v422
        %v582 = vunpack.c.h.b16 %v422
        %v583 = vunpack.c.l.b16 %v423
        %v584 = vunpack.c.h.b16 %v423
        %v585 = vunpack.c.l.b16 %v424
        %v586 = vunpack.c.h.b16 %v424
        %v587 = vunpack.c.l.b16 %v425
        %v588 = vunpack.c.h.b16 %v425
        %v589 = vunpack.c.l.b16 %v426
        %v590 = vunpack.c.h.b16 %v426
        %v591 = vunpack.c.l.b16 %v427
        %v592 = vunpack.c.h.b16 %v427
        %v593 = vunpack.c.l.b16 %v428
        %v594 = vunpack.c.h.b16 %v428
        %v595 = vpack.c.b16 %v535, %v531
        %v596 = vpack.c.b16 %v536, %v532
        %v597 = vpack.c.b16 %v537, %v533
        %v598 = vpack.c.b16 %v538, %v534
        %v599 = vpack.c.b16 %v543, %v539
        %v600 = vpack.c.b16 %v544, %v540
        %v601 = vpack.c.b16 %v545, %v541
        %v602 = vpack.c.b16 %v546, %v542
        %v603 = vpack.c.b16 %v551, %v547
        %v604 = vpack.c.b16 %v552, %v548
        %v605 = vpack.c.b16 %v553, %v549
        %v606 = vpack.c.b16 %v554, %v550
        %v607 = vpack.c.b16 %v559, %v555
        %v608 = vpack.c.b16 %v560, %v556
        %v609 = vpack.c.b16 %v561, %v557
        %v610 = vpack.c.b16 %v562, %v558
        %v611 = vpack.c.b16 %v567, %v563
        %v612 = vpack.c.b16 %v568, %v564
        %v613 = vpack.c.b16 %v569, %v565
        %v614 = vpack.c.b16 %v570, %v566
        %v615 = vpack.c.b16 %v575, %v571
        %v616 = vpack.c.b16 %v576, %v572
        %v617 = vpack.c.b16 %v577, %v573
        %v618 = vpack.c.b16 %v578, %v574
        %v619 = vpack.c.b16 %v583, %v579
        %v620 = vpack.c.b16 %v584, %v580
        %v621 = vpack.c.b16 %v585, %v581
        %v622 = vpack.c.b16 %v586, %v582
        %v623 = vpack.c.b16 %v591, %v587
        %v624 = vpack.c.b16 %v592, %v588
        %v625 = vpack.c.b16 %v593, %v589
        %v626 = vpack.c.b16 %v594, %v590
        %659 = vmatprep.subr.bf16.mxu0 %v596
        %660 = vmatpush1.bf16.msra.mxu0 %v595
        %661 = vmatprep.subr.bf16.mxu0 %v600
        %662 = vmatpush1.bf16.msra.mxu0 %v599
        %663 = vmatprep.subr.bf16.mxu0 %v604
        %664 = vmatpush1.bf16.msra.mxu0 %v603
        %665 = vmatprep.subr.bf16.mxu0 %v608
        %666 = vmatpush1.bf16.msra.mxu0 %v607
        %667 = vmatprep.subr.bf16.mxu0 %v612
        %668 = vmatpush1.bf16.msra.mxu0 %v611
        %669 = vmatprep.subr.bf16.mxu0 %v616
        %670 = vmatpush1.bf16.msra.mxu0 %v615
        %671 = vmatprep.subr.bf16.mxu0 %v620
        %672 = vmatpush1.bf16.msra.mxu0 %v619
        %673 = vmatprep.subr.bf16.mxu0 %v624
        %674 = vmatpush1.bf16.msra.mxu0 %v623
        %675 = vmatprep.subr.bf16.mxu0 0
        %676 = vmatpush1.bf16.msra.mxu0 0
        %677 = vmatprep.subr.bf16.mxu0 0
        %678 = vmatpush1.bf16.msra.mxu0 0
        %679 = vmatprep.subr.bf16.mxu0 0
        %680 = vmatpush1.bf16.msra.mxu0 0
        %681 = vmatprep.subr.bf16.mxu0 0
        %682 = vmatpush1.bf16.msra.mxu0 0
        %683 = vmatprep.subr.bf16.mxu0 0
        %684 = vmatpush1.bf16.msra.mxu0 0
        %685 = vmatprep.subr.bf16.mxu0 0
        %686 = vmatpush1.bf16.msra.mxu0 0
        %687 = vmatprep.subr.bf16.mxu0 0
        %688 = vmatpush1.bf16.msra.mxu0 0
        %689 = vmatprep.subr.bf16.mxu0 0
        %690 = vmatpush1.bf16.msra.mxu0 0
        %691 = vmatprep.mubr.bf16.mxu0 0
        %692 = vmatmul.mubr.bf16.gmra.mrb[0].mxu0 %v483
        %v693 = vpop.f32.mrb[0].mxu0
        %v694 = vadd.f32 %v434, %v693
        %v695 = vpop.f32.mrb[0].mxu0
        %v696 = vadd.f32 %v438, %v695
        %v697 = vpop.f32.mrb[0].mxu0
        %v698 = vadd.f32 %v434, %v697
        %v699 = vpop.f32.mrb[0].mxu0
        %v700 = vadd.f32 %v438, %v699
        %701 = vmatprep.mubr.bf16.mxu0 0
        %702 = vmatmul.mubr.bf16.gmra.mrb[0].mxu0 %v484
        %v703 = vpop.f32.mrb[0].mxu0
        %v704 = vadd.f32 %v434, %v703
        %v705 = vpop.f32.mrb[0].mxu0
        %v706 = vadd.f32 %v438, %v705
        %v707 = vpop.f32.mrb[0].mxu0
        %v708 = vadd.f32 %v434, %v707
        %v709 = vpop.f32.mrb[0].mxu0
        %v710 = vadd.f32 %v438, %v709
        %711 = vmatprep.mubr.bf16.mxu0 0
        %712 = vmatmul.mubr.bf16.gmra.mrb[0].mxu0 %v485
        %v713 = vpop.f32.mrb[0].mxu0
        %v714 = vadd.f32 %v434, %v713
        %v715 = vpop.f32.mrb[0].mxu0
        %v716 = vadd.f32 %v438, %v715
        %v717 = vpop.f32.mrb[0].mxu0
        %v718 = vadd.f32 %v434, %v717
        %v719 = vpop.f32.mrb[0].mxu0
        %v720 = vadd.f32 %v438, %v719
        %721 = vmatprep.mubr.bf16.mxu0 0
        %722 = vmatmul.mubr.bf16.gmra.mrb[0].mxu0 %v486
        %v723 = vpop.f32.mrb[0].mxu0
        %v724 = vadd.f32 %v434, %v723
        %v725 = vpop.f32.mrb[0].mxu0
        %v726 = vadd.f32 %v438, %v725
        %v727 = vpop.f32.mrb[0].mxu0
        %v728 = vadd.f32 %v434, %v727
        %v729 = vpop.f32.mrb[0].mxu0
        %v730 = vadd.f32 %v438, %v729
        %731 = vmatprep.mubr.bf16.mxu0 0
        %732 = vmatmul.mubr.bf16.gmra.mrb[0].mxu0 %v487
        %v733 = vpop.f32.mrb[0].mxu0
        %v734 = vadd.f32 %v434, %v733
        %v735 = vpop.f32.mrb[0].mxu0
        %v736 = vadd.f32 %v438, %v735
        %v737 = vpop.f32.mrb[0].mxu0
        %v738 = vadd.f32 %v434, %v737
        %v739 = vpop.f32.mrb[0].mxu0
        %v740 = vadd.f32 %v438, %v739
        %741 = vmatprep.mubr.bf16.mxu0 0
        %742 = vmatmul.mubr.bf16.gmra.mrb[0].mxu0 %v488
        %v743 = vpop.f32.mrb[0].mxu0
        %v744 = vadd.f32 %v434, %v743
        %v745 = vpop.f32.mrb[0].mxu0
        %v746 = vadd.f32 %v438, %v745
        %v747 = vpop.f32.mrb[0].mxu0
        %v748 = vadd.f32 %v434, %v747
        %v749 = vpop.f32.mrb[0].mxu0
        %v750 = vadd.f32 %v438, %v749
        %751 = vmatprep.mubr.bf16.mxu0 0
        %752 = vmatmul.mubr.bf16.gmra.mrb[0].mxu0 %v489
        %v753 = vpop.f32.mrb[0].mxu0
        %v754 = vadd.f32 %v434, %v753
        %v755 = vpop.f32.mrb[0].mxu0
        %v756 = vadd.f32 %v438, %v755
        %v757 = vpop.f32.mrb[0].mxu0
        %v758 = vadd.f32 %v434, %v757
        %v759 = vpop.f32.mrb[0].mxu0
        %v760 = vadd.f32 %v438, %v759
        %761 = vmatprep.mubr.bf16.mxu0 0
        %762 = vmatmul.mubr.bf16.gmra.mrb[0].mxu0 %v490
        %v763 = vpop.f32.mrb[0].mxu0
        %v764 = vadd.f32 %v434, %v763
        %v765 = vpop.f32.mrb[0].mxu0
        %v766 = vadd.f32 %v438, %v765
        %v767 = vpop.f32.mrb[0].mxu0
        %v768 = vadd.f32 %v434, %v767
        %v769 = vpop.f32.mrb[0].mxu0
        %v770 = vadd.f32 %v438, %v769
        %771 = vdwg.mxu0
        %772 = vmatprep.subr.bf16.mxu0 %v598
        %773 = vmatpush1.bf16.msra.mxu0 %v597
        %774 = vmatprep.subr.bf16.mxu0 %v602
        %775 = vmatpush1.bf16.msra.mxu0 %v601
        %776 = vmatprep.subr.bf16.mxu0 %v606
        %777 = vmatpush1.bf16.msra.mxu0 %v605
        %778 = vmatprep.subr.bf16.mxu0 %v610
        %779 = vmatpush1.bf16.msra.mxu0 %v609
        %780 = vmatprep.subr.bf16.mxu0 %v614
        %781 = vmatpush1.bf16.msra.mxu0 %v613
        %782 = vmatprep.subr.bf16.mxu0 %v618
        %783 = vmatpush1.bf16.msra.mxu0 %v617
        %784 = vmatprep.subr.bf16.mxu0 %v622
        %785 = vmatpush1.bf16.msra.mxu0 %v621
        %786 = vmatprep.subr.bf16.mxu0 %v626
        %787 = vmatpush1.bf16.msra.mxu0 %v625
        %788 = vmatprep.subr.bf16.mxu0 0
        %789 = vmatpush1.bf16.msra.mxu0 0
        %790 = vmatprep.subr.bf16.mxu0 0
        %791 = vmatpush1.bf16.msra.mxu0 0
        %792 = vmatprep.subr.bf16.mxu0 0
        %793 = vmatpush1.bf16.msra.mxu0 0
        %794 = vmatprep.subr.bf16.mxu0 0
        %795 = vmatpush1.bf16.msra.mxu0 0
        %796 = vmatprep.subr.bf16.mxu0 0
        %797 = vmatpush1.bf16.msra.mxu0 0
        %798 = vmatprep.subr.bf16.mxu0 0
        %799 = vmatpush1.bf16.msra.mxu0 0
        %800 = vmatprep.subr.bf16.mxu0 0
        %801 = vmatpush1.bf16.msra.mxu0 0
        %802 = vmatprep.subr.bf16.mxu0 0
        %803 = vmatpush1.bf16.msra.mxu0 0
        %804 = vmatprep.mubr.bf16.mxu0 0
        %805 = vmatmul.mubr.bf16.gmra.mrb[0].mxu0 %v483
        %v806 = vpop.f32.mrb[0].mxu0
        %v807 = vadd.f32 %v442, %v806
        %v808 = vpop.f32.mrb[0].mxu0
        %v809 = vadd.f32 %v446, %v808
        %v810 = vpop.f32.mrb[0].mxu0
        %v811 = vadd.f32 %v442, %v810
        %v812 = vpop.f32.mrb[0].mxu0
        %v813 = vadd.f32 %v446, %v812
        %814 = vmatprep.mubr.bf16.mxu0 0
        %815 = vmatmul.mubr.bf16.gmra.mrb[0].mxu0 %v484
        %v816 = vpop.f32.mrb[0].mxu0
        %v817 = vadd.f32 %v442, %v816
        %v818 = vpop.f32.mrb[0].mxu0
        %v819 = vadd.f32 %v446, %v818
        %v820 = vpop.f32.mrb[0].mxu0
        %v821 = vadd.f32 %v442, %v820
        %v822 = vpop.f32.mrb[0].mxu0
        %v823 = vadd.f32 %v446, %v822
        %824 = vmatprep.mubr.bf16.mxu0 0
        %825 = vmatmul.mubr.bf16.gmra.mrb[0].mxu0 %v485
        %v826 = vpop.f32.mrb[0].mxu0
        %v827 = vadd.f32 %v442, %v826
        %v828 = vpop.f32.mrb[0].mxu0
        %v829 = vadd.f32 %v446, %v828
        %v830 = vpop.f32.mrb[0].mxu0
        %v831 = vadd.f32 %v442, %v830
        %v832 = vpop.f32.mrb[0].mxu0
        %v833 = vadd.f32 %v446, %v832
        %834 = vmatprep.mubr.bf16.mxu0 0
        %835 = vmatmul.mubr.bf16.gmra.mrb[0].mxu0 %v486
        %v836 = vpop.f32.mrb[0].mxu0
        %v837 = vadd.f32 %v442, %v836
        %v838 = vpop.f32.mrb[0].mxu0
        %v839 = vadd.f32 %v446, %v838
        %v840 = vpop.f32.mrb[0].mxu0
        %v841 = vadd.f32 %v442, %v840
        %v842 = vpop.f32.mrb[0].mxu0
        %v843 = vadd.f32 %v446, %v842
        %844 = vmatprep.mubr.bf16.mxu0 0
        %845 = vmatmul.mubr.bf16.gmra.mrb[0].mxu0 %v487
        %v846 = vpop.f32.mrb[0].mxu0
        %v847 = vadd.f32 %v442, %v846
        %v848 = vpop.f32.mrb[0].mxu0
        %v849 = vadd.f32 %v446, %v848
        %v850 = vpop.f32.mrb[0].mxu0
        %v851 = vadd.f32 %v442, %v850
        %v852 = vpop.f32.mrb[0].mxu0
        %v853 = vadd.f32 %v446, %v852
        %854 = vmatprep.mubr.bf16.mxu0 0
        %855 = vmatmul.mubr.bf16.gmra.mrb[0].mxu0 %v488
        %v856 = vpop.f32.mrb[0].mxu0
        %v857 = vadd.f32 %v442, %v856
        %v858 = vpop.f32.mrb[0].mxu0
        %v859 = vadd.f32 %v446, %v858
        %v860 = vpop.f32.mrb[0].mxu0
        %v861 = vadd.f32 %v442, %v860
        %v862 = vpop.f32.mrb[0].mxu0
        %v863 = vadd.f32 %v446, %v862
        %864 = vmatprep.mubr.bf16.mxu0 0
        %865 = vmatmul.mubr.bf16.gmra.mrb[0].mxu0 %v489
        %v866 = vpop.f32.mrb[0].mxu0
        %v867 = vadd.f32 %v442, %v866
        %v868 = vpop.f32.mrb[0].mxu0
        %v869 = vadd.f32 %v446, %v868
        %v870 = vpop.f32.mrb[0].mxu0
        %v871 = vadd.f32 %v442, %v870
        %v872 = vpop.f32.mrb[0].mxu0
        %v873 = vadd.f32 %v446, %v872
        %874 = vmatprep.mubr.bf16.mxu0 0
        %875 = vmatmul.mubr.bf16.gmra.mrb[0].mxu0 %v490
        %v876 = vpop.f32.mrb[0].mxu0
        %v877 = vadd.f32 %v442, %v876
        %v878 = vpop.f32.mrb[0].mxu0
        %v879 = vadd.f32 %v446, %v878
        %v880 = vpop.f32.mrb[0].mxu0
        %v881 = vadd.f32 %v442, %v880
        %v882 = vpop.f32.mrb[0].mxu0
        %v883 = vadd.f32 %v446, %v882
        %884 = vdwg.mxu0
        %v885 = vmax.f32 %v694, 0.0
        %v886 = vmax.f32 %v696, 0.0
        %v887 = vmax.f32 %v807, 0.0
        %v888 = vmax.f32 %v809, 0.0
        %v889 = vmax.f32 %v698, 0.0
        %v890 = vmax.f32 %v700, 0.0
        %v891 = vmax.f32 %v811, 0.0
        %v892 = vmax.f32 %v813, 0.0
        %v893 = vmax.f32 %v704, 0.0
        %v894 = vmax.f32 %v706, 0.0
        %v895 = vmax.f32 %v817, 0.0
        %v896 = vmax.f32 %v819, 0.0
        %v897 = vmax.f32 %v708, 0.0
        %v898 = vmax.f32 %v710, 0.0
        %v899 = vmax.f32 %v821, 0.0
        %v900 = vmax.f32 %v823, 0.0
        %v901 = vmax.f32 %v714, 0.0
        %v902 = vmax.f32 %v716, 0.0
        %v903 = vmax.f32 %v827, 0.0
        %v904 = vmax.f32 %v829, 0.0
        %v905 = vmax.f32 %v718, 0.0
        %v906 = vmax.f32 %v720, 0.0
        %v907 = vmax.f32 %v831, 0.0
        %v908 = vmax.f32 %v833, 0.0
        %v909 = vmax.f32 %v724, 0.0
        %v910 = vmax.f32 %v726, 0.0
        %v911 = vmax.f32 %v837, 0.0
        %v912 = vmax.f32 %v839, 0.0
        %v913 = vmax.f32 %v728, 0.0
        %v914 = vmax.f32 %v730, 0.0
        %v915 = vmax.f32 %v841, 0.0
        %v916 = vmax.f32 %v843, 0.0
        %v917 = vmax.f32 %v734, 0.0
        %v918 = vmax.f32 %v736, 0.0
        %v919 = vmax.f32 %v847, 0.0
        %v920 = vmax.f32 %v849, 0.0
        %v921 = vmax.f32 %v738, 0.0
        %v922 = vmax.f32 %v740, 0.0
        %v923 = vmax.f32 %v851, 0.0
        %v924 = vmax.f32 %v853, 0.0
        %v925 = vmax.f32 %v744, 0.0
        %v926 = vmax.f32 %v746, 0.0
        %v927 = vmax.f32 %v857, 0.0
        %v928 = vmax.f32 %v859, 0.0
        %v929 = vmax.f32 %v748, 0.0
        %v930 = vmax.f32 %v750, 0.0
        %v931 = vmax.f32 %v861, 0.0
        %v932 = vmax.f32 %v863, 0.0
        %v933 = vmax.f32 %v754, 0.0
        %v934 = vmax.f32 %v756, 0.0
        %v935 = vmax.f32 %v867, 0.0
        %v936 = vmax.f32 %v869, 0.0
        %v937 = vmax.f32 %v758, 0.0
        %v938 = vmax.f32 %v760, 0.0
        %v939 = vmax.f32 %v871, 0.0
        %v940 = vmax.f32 %v873, 0.0
        %v941 = vmax.f32 %v764, 0.0
        %v942 = vmax.f32 %v766, 0.0
        %v943 = vmax.f32 %v877, 0.0
        %v944 = vmax.f32 %v879, 0.0
        %v945 = vmax.f32 %v768, 0.0
        %v946 = vmax.f32 %v770, 0.0
        %v947 = vmax.f32 %v881, 0.0
        %v948 = vmax.f32 %v883, 0.0
        %v949 = vpack.c.bf16 %v889, %v885
        %v950 = vpack.c.bf16 %v890, %v886
        %v951 = vpack.c.bf16 %v891, %v887
        %v952 = vpack.c.bf16 %v892, %v888
        %v953 = vpack.c.bf16 %v897, %v893
        %v954 = vpack.c.bf16 %v898, %v894
        %v955 = vpack.c.bf16 %v899, %v895
        %v956 = vpack.c.bf16 %v900, %v896
        %v957 = vpack.c.bf16 %v905, %v901
        %v958 = vpack.c.bf16 %v906, %v902
        %v959 = vpack.c.bf16 %v907, %v903
        %v960 = vpack.c.bf16 %v908, %v904
        %v961 = vpack.c.bf16 %v913, %v909
        %v962 = vpack.c.bf16 %v914, %v910
        %v963 = vpack.c.bf16 %v915, %v911
        %v964 = vpack.c.bf16 %v916, %v912
        %v965 = vpack.c.bf16 %v921, %v917
        %v966 = vpack.c.bf16 %v922, %v918
        %v967 = vpack.c.bf16 %v923, %v919
        %v968 = vpack.c.bf16 %v924, %v920
        %v969 = vpack.c.bf16 %v929, %v925
        %v970 = vpack.c.bf16 %v930, %v926
        %v971 = vpack.c.bf16 %v931, %v927
        %v972 = vpack.c.bf16 %v932, %v928
        %v973 = vpack.c.bf16 %v937, %v933
        %v974 = vpack.c.bf16 %v938, %v934
        %v975 = vpack.c.bf16 %v939, %v935
        %v976 = vpack.c.bf16 %v940, %v936
        %v977 = vpack.c.bf16 %v945, %v941
        %v978 = vpack.c.bf16 %v946, %v942
        %v979 = vpack.c.bf16 %v947, %v943
        %v980 = vpack.c.bf16 %v948, %v944
        %v981 = vld [vmem:[#allocation8] sm:$0xff]
        %v982 = vld [vmem:[#allocation8 + $0x8] sm:$0xff]
        %v983 = vld [vmem:[#allocation8 + $0x10] sm:$0xff]
        %v984 = vld [vmem:[#allocation8 + $0x18] sm:$0xff]
        %v985 = vld [vmem:[#allocation8 + $0x20] sm:$0xff]
        %v986 = vld [vmem:[#allocation8 + $0x28] sm:$0xff]
        %v987 = vld [vmem:[#allocation8 + $0x30] sm:$0xff]
        %v988 = vld [vmem:[#allocation8 + $0x38] sm:$0xff]
        %v989 = vld [vmem:[#allocation8 + $0x40] sm:$0xff]
        %v990 = vld [vmem:[#allocation8 + $0x48] sm:$0xff]
        %v991 = vld [vmem:[#allocation8 + $0x50] sm:$0xff]
        %v992 = vld [vmem:[#allocation8 + $0x58] sm:$0xff]
        %v993 = vld [vmem:[#allocation8 + $0x60] sm:$0xff]
        %v994 = vld [vmem:[#allocation8 + $0x68] sm:$0xff]
        %v995 = vld [vmem:[#allocation8 + $0x70] sm:$0xff]
        %v996 = vld [vmem:[#allocation8 + $0x78] sm:$0xff]
        %v997 = vld [vmem:[#allocation8 + $0x80] sm:$0xff]
        %v998 = vld [vmem:[#allocation8 + $0x88] sm:$0xff]
        %v999 = vld [vmem:[#allocation8 + $0x90] sm:$0xff]
        %v1000 = vld [vmem:[#allocation8 + $0x98] sm:$0xff]
        %v1001 = vld [vmem:[#allocation8 + $0xa0] sm:$0xff]
        %v1002 = vld [vmem:[#allocation8 + $0xa8] sm:$0xff]
        %v1003 = vld [vmem:[#allocation8 + $0xb0] sm:$0xff]
        %v1004 = vld [vmem:[#allocation8 + $0xb8] sm:$0xff]
        %v1005 = vld [vmem:[#allocation8 + $0xc0] sm:$0xff]
        %v1006 = vld [vmem:[#allocation8 + $0xc8] sm:$0xff]
        %v1007 = vld [vmem:[#allocation8 + $0xd0] sm:$0xff]
        %v1008 = vld [vmem:[#allocation8 + $0xd8] sm:$0xff]
        %v1009 = vld [vmem:[#allocation8 + $0xe0] sm:$0xff]
        %v1010 = vld [vmem:[#allocation8 + $0xe8] sm:$0xff]
        %v1011 = vld [vmem:[#allocation8 + $0xf0] sm:$0xff]
        %v1012 = vld [vmem:[#allocation8 + $0xf8] sm:$0xff]
        %v1013 = vld [vmem:[#allocation8 + $0x100] sm:$0xff]
        %v1014 = vld [vmem:[#allocation8 + $0x108] sm:$0xff]
        %v1015 = vld [vmem:[#allocation8 + $0x110] sm:$0xff]
        %v1016 = vld [vmem:[#allocation8 + $0x118] sm:$0xff]
        %v1017 = vld [vmem:[#allocation8 + $0x120] sm:$0xff]
        %v1018 = vld [vmem:[#allocation8 + $0x128] sm:$0xff]
        %v1019 = vld [vmem:[#allocation8 + $0x130] sm:$0xff]
        %v1020 = vld [vmem:[#allocation8 + $0x138] sm:$0xff]
        %v1021 = vld [vmem:[#allocation8 + $0x140] sm:$0xff]
        %v1022 = vld [vmem:[#allocation8 + $0x148] sm:$0xff]
        %v1023 = vld [vmem:[#allocation8 + $0x150] sm:$0xff]
        %v1024 = vld [vmem:[#allocation8 + $0x158] sm:$0xff]
        %v1025 = vld [vmem:[#allocation8 + $0x160] sm:$0xff]
        %v1026 = vld [vmem:[#allocation8 + $0x168] sm:$0xff]
        %v1027 = vld [vmem:[#allocation8 + $0x170] sm:$0xff]
        %v1028 = vld [vmem:[#allocation8 + $0x178] sm:$0xff]
        %v1029 = vld [vmem:[#allocation8 + $0x180] sm:$0xff]
        %v1030 = vld [vmem:[#allocation8 + $0x188] sm:$0xff]
        %v1031 = vld [vmem:[#allocation8 + $0x190] sm:$0xff]
        %v1032 = vld [vmem:[#allocation8 + $0x198] sm:$0xff]
        %v1033 = vld [vmem:[#allocation8 + $0x1a0] sm:$0xff]
        %v1034 = vld [vmem:[#allocation8 + $0x1a8] sm:$0xff]
        %v1035 = vld [vmem:[#allocation8 + $0x1b0] sm:$0xff]
        %v1036 = vld [vmem:[#allocation8 + $0x1b8] sm:$0xff]
        %v1037 = vld [vmem:[#allocation8 + $0x1c0] sm:$0xff]
        %v1038 = vld [vmem:[#allocation8 + $0x1c8] sm:$0xff]
        %v1039 = vld [vmem:[#allocation8 + $0x1d0] sm:$0xff]
        %v1040 = vld [vmem:[#allocation8 + $0x1d8] sm:$0xff]
        %v1041 = vld [vmem:[#allocation8 + $0x1e0] sm:$0xff]
        %v1042 = vld [vmem:[#allocation8 + $0x1e8] sm:$0xff]
        %v1043 = vld [vmem:[#allocation8 + $0x1f0] sm:$0xff]
        %v1044 = vld [vmem:[#allocation8 + $0x1f8] sm:$0xff]
        %v1045 = vld [vmem:[#allocation8 + $0x200] sm:$0xff]
        %v1046 = vld [vmem:[#allocation8 + $0x208] sm:$0xff]
        %v1047 = vld [vmem:[#allocation8 + $0x210] sm:$0xff]
        %v1048 = vld [vmem:[#allocation8 + $0x218] sm:$0xff]
        %v1049 = vld [vmem:[#allocation8 + $0x220] sm:$0xff]
        %v1050 = vld [vmem:[#allocation8 + $0x228] sm:$0xff]
        %v1051 = vld [vmem:[#allocation8 + $0x230] sm:$0xff]
        %v1052 = vld [vmem:[#allocation8 + $0x238] sm:$0xff]
        %v1053 = vld [vmem:[#allocation8 + $0x240] sm:$0xff]
        %v1054 = vld [vmem:[#allocation8 + $0x248] sm:$0xff]
        %v1055 = vld [vmem:[#allocation8 + $0x250] sm:$0xff]
        %v1056 = vld [vmem:[#allocation8 + $0x258] sm:$0xff]
        %v1057 = vld [vmem:[#allocation8 + $0x260] sm:$0xff]
        %v1058 = vld [vmem:[#allocation8 + $0x268] sm:$0xff]
        %v1059 = vld [vmem:[#allocation8 + $0x270] sm:$0xff]
        %v1060 = vld [vmem:[#allocation8 + $0x278] sm:$0xff]
        %v1061 = vld [vmem:[#allocation8 + $0x280] sm:$0xff]
        %v1062 = vld [vmem:[#allocation8 + $0x288] sm:$0xff]
        %v1063 = vld [vmem:[#allocation8 + $0x290] sm:$0xff]
        %v1064 = vld [vmem:[#allocation8 + $0x298] sm:$0xff]
        %v1065 = vld [vmem:[#allocation8 + $0x2a0] sm:$0xff]
        %v1066 = vld [vmem:[#allocation8 + $0x2a8] sm:$0xff]
        %v1067 = vld [vmem:[#allocation8 + $0x2b0] sm:$0xff]
        %v1068 = vld [vmem:[#allocation8 + $0x2b8] sm:$0xff]
        %v1069 = vld [vmem:[#allocation8 + $0x2c0] sm:$0xff]
        %v1070 = vld [vmem:[#allocation8 + $0x2c8] sm:$0xff]
        %v1071 = vld [vmem:[#allocation8 + $0x2d0] sm:$0xff]
        %v1072 = vld [vmem:[#allocation8 + $0x2d8] sm:$0xff]
        %v1073 = vld [vmem:[#allocation8 + $0x2e0] sm:$0xff]
        %v1074 = vld [vmem:[#allocation8 + $0x2e8] sm:$0xff]
        %v1075 = vld [vmem:[#allocation8 + $0x2f0] sm:$0xff]
        %v1076 = vld [vmem:[#allocation8 + $0x2f8] sm:$0xff]
        %v1077 = vld [vmem:[#allocation8 + $0x300] sm:$0xff]
        %v1078 = vld [vmem:[#allocation8 + $0x308] sm:$0xff]
        %v1079 = vld [vmem:[#allocation8 + $0x310] sm:$0xff]
        %v1080 = vld [vmem:[#allocation8 + $0x318] sm:$0xff]
        %v1081 = vld [vmem:[#allocation8 + $0x320] sm:$0xff]
        %v1082 = vld [vmem:[#allocation8 + $0x328] sm:$0xff]
        %v1083 = vld [vmem:[#allocation8 + $0x330] sm:$0xff]
        %v1084 = vld [vmem:[#allocation8 + $0x338] sm:$0xff]
        %v1085 = vld [vmem:[#allocation8 + $0x340] sm:$0xff]
        %v1086 = vld [vmem:[#allocation8 + $0x348] sm:$0xff]
        %v1087 = vld [vmem:[#allocation8 + $0x350] sm:$0xff]
        %v1088 = vld [vmem:[#allocation8 + $0x358] sm:$0xff]
        %v1089 = vld [vmem:[#allocation8 + $0x360] sm:$0xff]
        %v1090 = vld [vmem:[#allocation8 + $0x368] sm:$0xff]
        %v1091 = vld [vmem:[#allocation8 + $0x370] sm:$0xff]
        %v1092 = vld [vmem:[#allocation8 + $0x378] sm:$0xff]
        %v1093 = vld [vmem:[#allocation8 + $0x380] sm:$0xff]
        %v1094 = vld [vmem:[#allocation8 + $0x388] sm:$0xff]
        %v1095 = vld [vmem:[#allocation8 + $0x390] sm:$0xff]
        %v1096 = vld [vmem:[#allocation8 + $0x398] sm:$0xff]
        %v1097 = vld [vmem:[#allocation8 + $0x3a0] sm:$0xff]
        %v1098 = vld [vmem:[#allocation8 + $0x3a8] sm:$0xff]
        %v1099 = vld [vmem:[#allocation8 + $0x3b0] sm:$0xff]
        %v1100 = vld [vmem:[#allocation8 + $0x3b8] sm:$0xff]
        %v1101 = vld [vmem:[#allocation8 + $0x3c0] sm:$0xff]
        %v1102 = vld [vmem:[#allocation8 + $0x3c8] sm:$0xff]
        %v1103 = vld [vmem:[#allocation8 + $0x3d0] sm:$0xff]
        %v1104 = vld [vmem:[#allocation8 + $0x3d8] sm:$0xff]
        %v1105 = vld [vmem:[#allocation8 + $0x3e0] sm:$0xff]
        %v1106 = vld [vmem:[#allocation8 + $0x3e8] sm:$0xff]
        %v1107 = vld [vmem:[#allocation8 + $0x3f0] sm:$0xff]
        %v1108 = vld [vmem:[#allocation8 + $0x3f8] sm:$0xff]
        %v1109 = vld [vmem:[#allocation10] sm:$0xf]
        %v1111 = vlaneseq
        %v1112 = vshrl.u32 %v1111, 7
        %v1113 = vsub.s32 0, %v1112
        %v1114 = vrot.slane %v1109, %v1113
        %v1115 = vlaneseq
        %v1116 = vshrl.u32 %v1115, 7
        %v1117 = vsub.s32 1, %v1116
        %v1118 = vrot.slane %v1109, %v1117
        %v1119 = vlaneseq
        %v1120 = vshrl.u32 %v1119, 7
        %v1121 = vsub.s32 2, %v1120
        %v1122 = vrot.slane %v1109, %v1121
        %v1123 = vlaneseq
        %v1124 = vshrl.u32 %v1123, 7
        %v1125 = vsub.s32 3, %v1124
        %v1126 = vrot.slane %v1109, %v1125
        %v1259 = vunpack.c.l.b16 %v981
        %v1260 = vunpack.c.h.b16 %v981
        %v1261 = vunpack.c.l.b16 %v982
        %v1262 = vunpack.c.h.b16 %v982
        %v1263 = vunpack.c.l.b16 %v983
        %v1264 = vunpack.c.h.b16 %v983
        %v1265 = vunpack.c.l.b16 %v984
        %v1266 = vunpack.c.h.b16 %v984
        %v1267 = vunpack.c.l.b16 %v985
        %v1268 = vunpack.c.h.b16 %v985
        %v1269 = vunpack.c.l.b16 %v986
        %v1270 = vunpack.c.h.b16 %v986
        %v1271 = vunpack.c.l.b16 %v987
        %v1272 = vunpack.c.h.b16 %v987
        %v1273 = vunpack.c.l.b16 %v988
        %v1274 = vunpack.c.h.b16 %v988
        %v1275 = vunpack.c.l.b16 %v989
        %v1276 = vunpack.c.h.b16 %v989
        %v1277 = vunpack.c.l.b16 %v990
        %v1278 = vunpack.c.h.b16 %v990
        %v1279 = vunpack.c.l.b16 %v991
        %v1280 = vunpack.c.h.b16 %v991
        %v1281 = vunpack.c.l.b16 %v992
        %v1282 = vunpack.c.h.b16 %v992
        %v1283 = vunpack.c.l.b16 %v993
        %v1284 = vunpack.c.h.b16 %v993
        %v1285 = vunpack.c.l.b16 %v994
        %v1286 = vunpack.c.h.b16 %v994
        %v1287 = vunpack.c.l.b16 %v995
        %v1288 = vunpack.c.h.b16 %v995
        %v1289 = vunpack.c.l.b16 %v996
        %v1290 = vunpack.c.h.b16 %v996
        %v1291 = vunpack.c.l.b16 %v997
        %v1292 = vunpack.c.h.b16 %v997
        %v1293 = vunpack.c.l.b16 %v998
        %v1294 = vunpack.c.h.b16 %v998
        %v1295 = vunpack.c.l.b16 %v999
        %v1296 = vunpack.c.h.b16 %v999
        %v1297 = vunpack.c.l.b16 %v1000
        %v1298 = vunpack.c.h.b16 %v1000
        %v1299 = vunpack.c.l.b16 %v1001
        %v1300 = vunpack.c.h.b16 %v1001
        %v1301 = vunpack.c.l.b16 %v1002
        %v1302 = vunpack.c.h.b16 %v1002
        %v1303 = vunpack.c.l.b16 %v1003
        %v1304 = vunpack.c.h.b16 %v1003
        %v1305 = vunpack.c.l.b16 %v1004
        %v1306 = vunpack.c.h.b16 %v1004
        %v1307 = vunpack.c.l.b16 %v1005
        %v1308 = vunpack.c.h.b16 %v1005
        %v1309 = vunpack.c.l.b16 %v1006
        %v1310 = vunpack.c.h.b16 %v1006
        %v1311 = vunpack.c.l.b16 %v1007
        %v1312 = vunpack.c.h.b16 %v1007
        %v1313 = vunpack.c.l.b16 %v1008
        %v1314 = vunpack.c.h.b16 %v1008
        %v1315 = vunpack.c.l.b16 %v1009
        %v1316 = vunpack.c.h.b16 %v1009
        %v1317 = vunpack.c.l.b16 %v1010
        %v1318 = vunpack.c.h.b16 %v1010
        %v1319 = vunpack.c.l.b16 %v1011
        %v1320 = vunpack.c.h.b16 %v1011
        %v1321 = vunpack.c.l.b16 %v1012
        %v1322 = vunpack.c.h.b16 %v1012
        %v1323 = vunpack.c.l.b16 %v1013
        %v1324 = vunpack.c.h.b16 %v1013
        %v1325 = vunpack.c.l.b16 %v1014
        %v1326 = vunpack.c.h.b16 %v1014
        %v1327 = vunpack.c.l.b16 %v1015
        %v1328 = vunpack.c.h.b16 %v1015
        %v1329 = vunpack.c.l.b16 %v1016
        %v1330 = vunpack.c.h.b16 %v1016
        %v1331 = vunpack.c.l.b16 %v1017
        %v1332 = vunpack.c.h.b16 %v1017
        %v1333 = vunpack.c.l.b16 %v1018
        %v1334 = vunpack.c.h.b16 %v1018
        %v1335 = vunpack.c.l.b16 %v1019
        %v1336 = vunpack.c.h.b16 %v1019
        %v1337 = vunpack.c.l.b16 %v1020
        %v1338 = vunpack.c.h.b16 %v1020
        %v1339 = vunpack.c.l.b16 %v1021
        %v1340 = vunpack.c.h.b16 %v1021
        %v1341 = vunpack.c.l.b16 %v1022
        %v1342 = vunpack.c.h.b16 %v1022
        %v1343 = vunpack.c.l.b16 %v1023
        %v1344 = vunpack.c.h.b16 %v1023
        %v1345 = vunpack.c.l.b16 %v1024
        %v1346 = vunpack.c.h.b16 %v1024
        %v1347 = vunpack.c.l.b16 %v1025
        %v1348 = vunpack.c.h.b16 %v1025
        %v1349 = vunpack.c.l.b16 %v1026
        %v1350 = vunpack.c.h.b16 %v1026
        %v1351 = vunpack.c.l.b16 %v1027
        %v1352 = vunpack.c.h.b16 %v1027
        %v1353 = vunpack.c.l.b16 %v1028
        %v1354 = vunpack.c.h.b16 %v1028
        %v1355 = vunpack.c.l.b16 %v1029
        %v1356 = vunpack.c.h.b16 %v1029
        %v1357 = vunpack.c.l.b16 %v1030
        %v1358 = vunpack.c.h.b16 %v1030
        %v1359 = vunpack.c.l.b16 %v1031
        %v1360 = vunpack.c.h.b16 %v1031
        %v1361 = vunpack.c.l.b16 %v1032
        %v1362 = vunpack.c.h.b16 %v1032
        %v1363 = vunpack.c.l.b16 %v1033
        %v1364 = vunpack.c.h.b16 %v1033
        %v1365 = vunpack.c.l.b16 %v1034
        %v1366 = vunpack.c.h.b16 %v1034
        %v1367 = vunpack.c.l.b16 %v1035
        %v1368 = vunpack.c.h.b16 %v1035
        %v1369 = vunpack.c.l.b16 %v1036
        %v1370 = vunpack.c.h.b16 %v1036
        %v1371 = vunpack.c.l.b16 %v1037
        %v1372 = vunpack.c.h.b16 %v1037
        %v1373 = vunpack.c.l.b16 %v1038
        %v1374 = vunpack.c.h.b16 %v1038
        %v1375 = vunpack.c.l.b16 %v1039
        %v1376 = vunpack.c.h.b16 %v1039
        %v1377 = vunpack.c.l.b16 %v1040
        %v1378 = vunpack.c.h.b16 %v1040
        %v1379 = vunpack.c.l.b16 %v1041
        %v1380 = vunpack.c.h.b16 %v1041
        %v1381 = vunpack.c.l.b16 %v1042
        %v1382 = vunpack.c.h.b16 %v1042
        %v1383 = vunpack.c.l.b16 %v1043
        %v1384 = vunpack.c.h.b16 %v1043
        %v1385 = vunpack.c.l.b16 %v1044
        %v1386 = vunpack.c.h.b16 %v1044
        %v1387 = vunpack.c.l.b16 %v1045
        %v1388 = vunpack.c.h.b16 %v1045
        %v1389 = vunpack.c.l.b16 %v1046
        %v1390 = vunpack.c.h.b16 %v1046
        %v1391 = vunpack.c.l.b16 %v1047
        %v1392 = vunpack.c.h.b16 %v1047
        %v1393 = vunpack.c.l.b16 %v1048
        %v1394 = vunpack.c.h.b16 %v1048
        %v1395 = vunpack.c.l.b16 %v1049
        %v1396 = vunpack.c.h.b16 %v1049
        %v1397 = vunpack.c.l.b16 %v1050
        %v1398 = vunpack.c.h.b16 %v1050
        %v1399 = vunpack.c.l.b16 %v1051
        %v1400 = vunpack.c.h.b16 %v1051
        %v1401 = vunpack.c.l.b16 %v1052
        %v1402 = vunpack.c.h.b16 %v1052
        %v1403 = vunpack.c.l.b16 %v1053
        %v1404 = vunpack.c.h.b16 %v1053
        %v1405 = vunpack.c.l.b16 %v1054
        %v1406 = vunpack.c.h.b16 %v1054
        %v1407 = vunpack.c.l.b16 %v1055
        %v1408 = vunpack.c.h.b16 %v1055
        %v1409 = vunpack.c.l.b16 %v1056
        %v1410 = vunpack.c.h.b16 %v1056
        %v1411 = vunpack.c.l.b16 %v1057
        %v1412 = vunpack.c.h.b16 %v1057
        %v1413 = vunpack.c.l.b16 %v1058
        %v1414 = vunpack.c.h.b16 %v1058
        %v1415 = vunpack.c.l.b16 %v1059
        %v1416 = vunpack.c.h.b16 %v1059
        %v1417 = vunpack.c.l.b16 %v1060
        %v1418 = vunpack.c.h.b16 %v1060
        %v1419 = vunpack.c.l.b16 %v1061
        %v1420 = vunpack.c.h.b16 %v1061
        %v1421 = vunpack.c.l.b16 %v1062
        %v1422 = vunpack.c.h.b16 %v1062
        %v1423 = vunpack.c.l.b16 %v1063
        %v1424 = vunpack.c.h.b16 %v1063
        %v1425 = vunpack.c.l.b16 %v1064
        %v1426 = vunpack.c.h.b16 %v1064
        %v1427 = vunpack.c.l.b16 %v1065
        %v1428 = vunpack.c.h.b16 %v1065
        %v1429 = vunpack.c.l.b16 %v1066
        %v1430 = vunpack.c.h.b16 %v1066
        %v1431 = vunpack.c.l.b16 %v1067
        %v1432 = vunpack.c.h.b16 %v1067
        %v1433 = vunpack.c.l.b16 %v1068
        %v1434 = vunpack.c.h.b16 %v1068
        %v1435 = vunpack.c.l.b16 %v1069
        %v1436 = vunpack.c.h.b16 %v1069
        %v1437 = vunpack.c.l.b16 %v1070
        %v1438 = vunpack.c.h.b16 %v1070
        %v1439 = vunpack.c.l.b16 %v1071
        %v1440 = vunpack.c.h.b16 %v1071
        %v1441 = vunpack.c.l.b16 %v1072
        %v1442 = vunpack.c.h.b16 %v1072
        %v1443 = vunpack.c.l.b16 %v1073
        %v1444 = vunpack.c.h.b16 %v1073
        %v1445 = vunpack.c.l.b16 %v1074
        %v1446 = vunpack.c.h.b16 %v1074
        %v1447 = vunpack.c.l.b16 %v1075
        %v1448 = vunpack.c.h.b16 %v1075
        %v1449 = vunpack.c.l.b16 %v1076
        %v1450 = vunpack.c.h.b16 %v1076
        %v1451 = vunpack.c.l.b16 %v1077
        %v1452 = vunpack.c.h.b16 %v1077
        %v1453 = vunpack.c.l.b16 %v1078
        %v1454 = vunpack.c.h.b16 %v1078
        %v1455 = vunpack.c.l.b16 %v1079
        %v1456 = vunpack.c.h.b16 %v1079
        %v1457 = vunpack.c.l.b16 %v1080
        %v1458 = vunpack.c.h.b16 %v1080
        %v1459 = vunpack.c.l.b16 %v1081
        %v1460 = vunpack.c.h.b16 %v1081
        %v1461 = vunpack.c.l.b16 %v1082
        %v1462 = vunpack.c.h.b16 %v1082
        %v1463 = vunpack.c.l.b16 %v1083
        %v1464 = vunpack.c.h.b16 %v1083
        %v1465 = vunpack.c.l.b16 %v1084
        %v1466 = vunpack.c.h.b16 %v1084
        %v1467 = vunpack.c.l.b16 %v1085
        %v1468 = vunpack.c.h.b16 %v1085
        %v1469 = vunpack.c.l.b16 %v1086
        %v1470 = vunpack.c.h.b16 %v1086
        %v1471 = vunpack.c.l.b16 %v1087
        %v1472 = vunpack.c.h.b16 %v1087
        %v1473 = vunpack.c.l.b16 %v1088
        %v1474 = vunpack.c.h.b16 %v1088
        %v1475 = vunpack.c.l.b16 %v1089
        %v1476 = vunpack.c.h.b16 %v1089
        %v1477 = vunpack.c.l.b16 %v1090
        %v1478 = vunpack.c.h.b16 %v1090
        %v1479 = vunpack.c.l.b16 %v1091
        %v1480 = vunpack.c.h.b16 %v1091
        %v1481 = vunpack.c.l.b16 %v1092
        %v1482 = vunpack.c.h.b16 %v1092
        %v1483 = vunpack.c.l.b16 %v1093
        %v1484 = vunpack.c.h.b16 %v1093
        %v1485 = vunpack.c.l.b16 %v1094
        %v1486 = vunpack.c.h.b16 %v1094
        %v1487 = vunpack.c.l.b16 %v1095
        %v1488 = vunpack.c.h.b16 %v1095
        %v1489 = vunpack.c.l.b16 %v1096
        %v1490 = vunpack.c.h.b16 %v1096
        %v1491 = vunpack.c.l.b16 %v1097
        %v1492 = vunpack.c.h.b16 %v1097
        %v1493 = vunpack.c.l.b16 %v1098
        %v1494 = vunpack.c.h.b16 %v1098
        %v1495 = vunpack.c.l.b16 %v1099
        %v1496 = vunpack.c.h.b16 %v1099
        %v1497 = vunpack.c.l.b16 %v1100
        %v1498 = vunpack.c.h.b16 %v1100
        %v1499 = vunpack.c.l.b16 %v1101
        %v1500 = vunpack.c.h.b16 %v1101
        %v1501 = vunpack.c.l.b16 %v1102
        %v1502 = vunpack.c.h.b16 %v1102
        %v1503 = vunpack.c.l.b16 %v1103
        %v1504 = vunpack.c.h.b16 %v1103
        %v1505 = vunpack.c.l.b16 %v1104
        %v1506 = vunpack.c.h.b16 %v1104
        %v1507 = vunpack.c.l.b16 %v1105
        %v1508 = vunpack.c.h.b16 %v1105
        %v1509 = vunpack.c.l.b16 %v1106
        %v1510 = vunpack.c.h.b16 %v1106
        %v1511 = vunpack.c.l.b16 %v1107
        %v1512 = vunpack.c.h.b16 %v1107
        %v1513 = vunpack.c.l.b16 %v1108
        %v1514 = vunpack.c.h.b16 %v1108
        %v1515 = vpack.c.b16 %v1263, %v1259
        %v1516 = vpack.c.b16 %v1264, %v1260
        %v1517 = vpack.c.b16 %v1265, %v1261
        %v1518 = vpack.c.b16 %v1266, %v1262
        %v1519 = vpack.c.b16 %v1271, %v1267
        %v1520 = vpack.c.b16 %v1272, %v1268
        %v1521 = vpack.c.b16 %v1273, %v1269
        %v1522 = vpack.c.b16 %v1274, %v1270
        %v1523 = vpack.c.b16 %v1279, %v1275
        %v1524 = vpack.c.b16 %v1280, %v1276
        %v1525 = vpack.c.b16 %v1281, %v1277
        %v1526 = vpack.c.b16 %v1282, %v1278
        %v1527 = vpack.c.b16 %v1287, %v1283
        %v1528 = vpack.c.b16 %v1288, %v1284
        %v1529 = vpack.c.b16 %v1289, %v1285
        %v1530 = vpack.c.b16 %v1290, %v1286
        %v1531 = vpack.c.b16 %v1295, %v1291
        %v1532 = vpack.c.b16 %v1296, %v1292
        %v1533 = vpack.c.b16 %v1297, %v1293
        %v1534 = vpack.c.b16 %v1298, %v1294
        %v1535 = vpack.c.b16 %v1303, %v1299
        %v1536 = vpack.c.b16 %v1304, %v1300
        %v1537 = vpack.c.b16 %v1305, %v1301
        %v1538 = vpack.c.b16 %v1306, %v1302
        %v1539 = vpack.c.b16 %v1311, %v1307
        %v1540 = vpack.c.b16 %v1312, %v1308
        %v1541 = vpack.c.b16 %v1313, %v1309
        %v1542 = vpack.c.b16 %v1314, %v1310
        %v1543 = vpack.c.b16 %v1319, %v1315
        %v1544 = vpack.c.b16 %v1320, %v1316
        %v1545 = vpack.c.b16 %v1321, %v1317
        %v1546 = vpack.c.b16 %v1322, %v1318
        %v1547 = vpack.c.b16 %v1327, %v1323
        %v1548 = vpack.c.b16 %v1328, %v1324
        %v1549 = vpack.c.b16 %v1329, %v1325
        %v1550 = vpack.c.b16 %v1330, %v1326
        %v1551 = vpack.c.b16 %v1335, %v1331
        %v1552 = vpack.c.b16 %v1336, %v1332
        %v1553 = vpack.c.b16 %v1337, %v1333
        %v1554 = vpack.c.b16 %v1338, %v1334
        %v1555 = vpack.c.b16 %v1343, %v1339
        %v1556 = vpack.c.b16 %v1344, %v1340
        %v1557 = vpack.c.b16 %v1345, %v1341
        %v1558 = vpack.c.b16 %v1346, %v1342
        %v1559 = vpack.c.b16 %v1351, %v1347
        %v1560 = vpack.c.b16 %v1352, %v1348
        %v1561 = vpack.c.b16 %v1353, %v1349
        %v1562 = vpack.c.b16 %v1354, %v1350
        %v1563 = vpack.c.b16 %v1359, %v1355
        %v1564 = vpack.c.b16 %v1360, %v1356
        %v1565 = vpack.c.b16 %v1361, %v1357
        %v1566 = vpack.c.b16 %v1362, %v1358
        %v1567 = vpack.c.b16 %v1367, %v1363
        %v1568 = vpack.c.b16 %v1368, %v1364
        %v1569 = vpack.c.b16 %v1369, %v1365
        %v1570 = vpack.c.b16 %v1370, %v1366
        %v1571 = vpack.c.b16 %v1375, %v1371
        %v1572 = vpack.c.b16 %v1376, %v1372
        %v1573 = vpack.c.b16 %v1377, %v1373
        %v1574 = vpack.c.b16 %v1378, %v1374
        %v1575 = vpack.c.b16 %v1383, %v1379
        %v1576 = vpack.c.b16 %v1384, %v1380
        %v1577 = vpack.c.b16 %v1385, %v1381
        %v1578 = vpack.c.b16 %v1386, %v1382
        %v1579 = vpack.c.b16 %v1391, %v1387
        %v1580 = vpack.c.b16 %v1392, %v1388
        %v1581 = vpack.c.b16 %v1393, %v1389
        %v1582 = vpack.c.b16 %v1394, %v1390
        %v1583 = vpack.c.b16 %v1399, %v1395
        %v1584 = vpack.c.b16 %v1400, %v1396
        %v1585 = vpack.c.b16 %v1401, %v1397
        %v1586 = vpack.c.b16 %v1402, %v1398
        %v1587 = vpack.c.b16 %v1407, %v1403
        %v1588 = vpack.c.b16 %v1408, %v1404
        %v1589 = vpack.c.b16 %v1409, %v1405
        %v1590 = vpack.c.b16 %v1410, %v1406
        %v1591 = vpack.c.b16 %v1415, %v1411
        %v1592 = vpack.c.b16 %v1416, %v1412
        %v1593 = vpack.c.b16 %v1417, %v1413
        %v1594 = vpack.c.b16 %v1418, %v1414
        %v1595 = vpack.c.b16 %v1423, %v1419
        %v1596 = vpack.c.b16 %v1424, %v1420
        %v1597 = vpack.c.b16 %v1425, %v1421
        %v1598 = vpack.c.b16 %v1426, %v1422
        %v1599 = vpack.c.b16 %v1431, %v1427
        %v1600 = vpack.c.b16 %v1432, %v1428
        %v1601 = vpack.c.b16 %v1433, %v1429
        %v1602 = vpack.c.b16 %v1434, %v1430
        %v1603 = vpack.c.b16 %v1439, %v1435
        %v1604 = vpack.c.b16 %v1440, %v1436
        %v1605 = vpack.c.b16 %v1441, %v1437
        %v1606 = vpack.c.b16 %v1442, %v1438
        %v1607 = vpack.c.b16 %v1447, %v1443
        %v1608 = vpack.c.b16 %v1448, %v1444
        %v1609 = vpack.c.b16 %v1449, %v1445
        %v1610 = vpack.c.b16 %v1450, %v1446
        %v1611 = vpack.c.b16 %v1455, %v1451
        %v1612 = vpack.c.b16 %v1456, %v1452
        %v1613 = vpack.c.b16 %v1457, %v1453
        %v1614 = vpack.c.b16 %v1458, %v1454
        %v1615 = vpack.c.b16 %v1463, %v1459
        %v1616 = vpack.c.b16 %v1464, %v1460
        %v1617 = vpack.c.b16 %v1465, %v1461
        %v1618 = vpack.c.b16 %v1466, %v1462
        %v1619 = vpack.c.b16 %v1471, %v1467
        %v1620 = vpack.c.b16 %v1472, %v1468
        %v1621 = vpack.c.b16 %v1473, %v1469
        %v1622 = vpack.c.b16 %v1474, %v1470
        %v1623 = vpack.c.b16 %v1479, %v1475
        %v1624 = vpack.c.b16 %v1480, %v1476
        %v1625 = vpack.c.b16 %v1481, %v1477
        %v1626 = vpack.c.b16 %v1482, %v1478
        %v1627 = vpack.c.b16 %v1487, %v1483
        %v1628 = vpack.c.b16 %v1488, %v1484
        %v1629 = vpack.c.b16 %v1489, %v1485
        %v1630 = vpack.c.b16 %v1490, %v1486
        %v1631 = vpack.c.b16 %v1495, %v1491
        %v1632 = vpack.c.b16 %v1496, %v1492
        %v1633 = vpack.c.b16 %v1497, %v1493
        %v1634 = vpack.c.b16 %v1498, %v1494
        %v1635 = vpack.c.b16 %v1503, %v1499
        %v1636 = vpack.c.b16 %v1504, %v1500
        %v1637 = vpack.c.b16 %v1505, %v1501
        %v1638 = vpack.c.b16 %v1506, %v1502
        %v1639 = vpack.c.b16 %v1511, %v1507
        %v1640 = vpack.c.b16 %v1512, %v1508
        %v1641 = vpack.c.b16 %v1513, %v1509
        %v1642 = vpack.c.b16 %v1514, %v1510
        %1771 = vmatprep.subr.bf16.mxu0 %v1516
        %1772 = vmatpush1.bf16.msra.mxu0 %v1515
        %1773 = vmatprep.subr.bf16.mxu0 %v1520
        %1774 = vmatpush1.bf16.msra.mxu0 %v1519
        %1775 = vmatprep.subr.bf16.mxu0 %v1524
        %1776 = vmatpush1.bf16.msra.mxu0 %v1523
        %1777 = vmatprep.subr.bf16.mxu0 %v1528
        %1778 = vmatpush1.bf16.msra.mxu0 %v1527
        %1779 = vmatprep.subr.bf16.mxu0 %v1532
        %1780 = vmatpush1.bf16.msra.mxu0 %v1531
        %1781 = vmatprep.subr.bf16.mxu0 %v1536
        %1782 = vmatpush1.bf16.msra.mxu0 %v1535
        %1783 = vmatprep.subr.bf16.mxu0 %v1540
        %1784 = vmatpush1.bf16.msra.mxu0 %v1539
        %1785 = vmatprep.subr.bf16.mxu0 %v1544
        %1786 = vmatpush1.bf16.msra.mxu0 %v1543
        %1787 = vmatprep.subr.bf16.mxu0 %v1548
        %1788 = vmatpush1.bf16.msra.mxu0 %v1547
        %1789 = vmatprep.subr.bf16.mxu0 %v1552
        %1790 = vmatpush1.bf16.msra.mxu0 %v1551
        %1791 = vmatprep.subr.bf16.mxu0 %v1556
        %1792 = vmatpush1.bf16.msra.mxu0 %v1555
        %1793 = vmatprep.subr.bf16.mxu0 %v1560
        %1794 = vmatpush1.bf16.msra.mxu0 %v1559
        %1795 = vmatprep.subr.bf16.mxu0 %v1564
        %1796 = vmatpush1.bf16.msra.mxu0 %v1563
        %1797 = vmatprep.subr.bf16.mxu0 %v1568
        %1798 = vmatpush1.bf16.msra.mxu0 %v1567
        %1799 = vmatprep.subr.bf16.mxu0 %v1572
        %1800 = vmatpush1.bf16.msra.mxu0 %v1571
        %1801 = vmatprep.subr.bf16.mxu0 %v1576
        %1802 = vmatpush1.bf16.msra.mxu0 %v1575
        %1803 = vmatprep.mubr.bf16.mxu0 %v950
        %1804 = vmatmul.mubr.bf16.gmra.mrb[0].mxu0 %v949
        %v1805 = vpop.f32.mrb[0].mxu0
        %v1806 = vadd.f32 %v1114, %v1805
        %v1807 = vpop.f32.mrb[0].mxu0
        %v1808 = vadd.f32 %v1118, %v1807
        %v1809 = vpop.f32.mrb[0].mxu0
        %v1810 = vadd.f32 %v1114, %v1809
        %v1811 = vpop.f32.mrb[0].mxu0
        %v1812 = vadd.f32 %v1118, %v1811
        %1813 = vmatprep.mubr.bf16.mxu0 %v954
        %1814 = vmatmul.mubr.bf16.gmra.mrb[0].mxu0 %v953
        %v1815 = vpop.f32.mrb[0].mxu0
        %v1816 = vadd.f32 %v1114, %v1815
        %v1817 = vpop.f32.mrb[0].mxu0
        %v1818 = vadd.f32 %v1118, %v1817
        %v1819 = vpop.f32.mrb[0].mxu0
        %v1820 = vadd.f32 %v1114, %v1819
        %v1821 = vpop.f32.mrb[0].mxu0
        %v1822 = vadd.f32 %v1118, %v1821
        %1823 = vmatprep.mubr.bf16.mxu0 %v958
        %1824 = vmatmul.mubr.bf16.gmra.mrb[0].mxu0 %v957
        %v1825 = vpop.f32.mrb[0].mxu0
        %v1826 = vadd.f32 %v1114, %v1825
        %v1827 = vpop.f32.mrb[0].mxu0
        %v1828 = vadd.f32 %v1118, %v1827
        %v1829 = vpop.f32.mrb[0].mxu0
        %v1830 = vadd.f32 %v1114, %v1829
        %v1831 = vpop.f32.mrb[0].mxu0
        %v1832 = vadd.f32 %v1118, %v1831
        %1833 = vmatprep.mubr.bf16.mxu0 %v962
        %1834 = vmatmul.mubr.bf16.gmra.mrb[0].mxu0 %v961
        %v1835 = vpop.f32.mrb[0].mxu0
        %v1836 = vadd.f32 %v1114, %v1835
        %v1837 = vpop.f32.mrb[0].mxu0
        %v1838 = vadd.f32 %v1118, %v1837
        %v1839 = vpop.f32.mrb[0].mxu0
        %v1840 = vadd.f32 %v1114, %v1839
        %v1841 = vpop.f32.mrb[0].mxu0
        %v1842 = vadd.f32 %v1118, %v1841
        %1843 = vmatprep.mubr.bf16.mxu0 %v966
        %1844 = vmatmul.mubr.bf16.gmra.mrb[0].mxu0 %v965
        %v1845 = vpop.f32.mrb[0].mxu0
        %v1846 = vadd.f32 %v1114, %v1845
        %v1847 = vpop.f32.mrb[0].mxu0
        %v1848 = vadd.f32 %v1118, %v1847
        %v1849 = vpop.f32.mrb[0].mxu0
        %v1850 = vadd.f32 %v1114, %v1849
        %v1851 = vpop.f32.mrb[0].mxu0
        %v1852 = vadd.f32 %v1118, %v1851
        %1853 = vmatprep.mubr.bf16.mxu0 %v970
        %1854 = vmatmul.mubr.bf16.gmra.mrb[0].mxu0 %v969
        %v1855 = vpop.f32.mrb[0].mxu0
        %v1856 = vadd.f32 %v1114, %v1855
        %v1857 = vpop.f32.mrb[0].mxu0
        %v1858 = vadd.f32 %v1118, %v1857
        %v1859 = vpop.f32.mrb[0].mxu0
        %v1860 = vadd.f32 %v1114, %v1859
        %v1861 = vpop.f32.mrb[0].mxu0
        %v1862 = vadd.f32 %v1118, %v1861
        %1863 = vmatprep.mubr.bf16.mxu0 %v974
        %1864 = vmatmul.mubr.bf16.gmra.mrb[0].mxu0 %v973
        %v1865 = vpop.f32.mrb[0].mxu0
        %v1866 = vadd.f32 %v1114, %v1865
        %v1867 = vpop.f32.mrb[0].mxu0
        %v1868 = vadd.f32 %v1118, %v1867
        %v1869 = vpop.f32.mrb[0].mxu0
        %v1870 = vadd.f32 %v1114, %v1869
        %v1871 = vpop.f32.mrb[0].mxu0
        %v1872 = vadd.f32 %v1118, %v1871
        %1873 = vmatprep.mubr.bf16.mxu0 %v978
        %1874 = vmatmul.mubr.bf16.gmra.mrb[0].mxu0 %v977
        %v1875 = vpop.f32.mrb[0].mxu0
        %v1876 = vadd.f32 %v1114, %v1875
        %v1877 = vpop.f32.mrb[0].mxu0
        %v1878 = vadd.f32 %v1118, %v1877
        %v1879 = vpop.f32.mrb[0].mxu0
        %v1880 = vadd.f32 %v1114, %v1879
        %v1881 = vpop.f32.mrb[0].mxu0
        %v1882 = vadd.f32 %v1118, %v1881
        %1883 = vdwg.mxu0
        %1884 = vmatprep.subr.bf16.mxu0 %v1580
        %1885 = vmatpush1.bf16.msra.mxu0 %v1579
        %1886 = vmatprep.subr.bf16.mxu0 %v1584
        %1887 = vmatpush1.bf16.msra.mxu0 %v1583
        %1888 = vmatprep.subr.bf16.mxu0 %v1588
        %1889 = vmatpush1.bf16.msra.mxu0 %v1587
        %1890 = vmatprep.subr.bf16.mxu0 %v1592
        %1891 = vmatpush1.bf16.msra.mxu0 %v1591
        %1892 = vmatprep.subr.bf16.mxu0 %v1596
        %1893 = vmatpush1.bf16.msra.mxu0 %v1595
        %1894 = vmatprep.subr.bf16.mxu0 %v1600
        %1895 = vmatpush1.bf16.msra.mxu0 %v1599
        %1896 = vmatprep.subr.bf16.mxu0 %v1604
        %1897 = vmatpush1.bf16.msra.mxu0 %v1603
        %1898 = vmatprep.subr.bf16.mxu0 %v1608
        %1899 = vmatpush1.bf16.msra.mxu0 %v1607
        %1900 = vmatprep.subr.bf16.mxu0 %v1612
        %1901 = vmatpush1.bf16.msra.mxu0 %v1611
        %1902 = vmatprep.subr.bf16.mxu0 %v1616
        %1903 = vmatpush1.bf16.msra.mxu0 %v1615
        %1904 = vmatprep.subr.bf16.mxu0 %v1620
        %1905 = vmatpush1.bf16.msra.mxu0 %v1619
        %1906 = vmatprep.subr.bf16.mxu0 %v1624
        %1907 = vmatpush1.bf16.msra.mxu0 %v1623
        %1908 = vmatprep.subr.bf16.mxu0 %v1628
        %1909 = vmatpush1.bf16.msra.mxu0 %v1627
        %1910 = vmatprep.subr.bf16.mxu0 %v1632
        %1911 = vmatpush1.bf16.msra.mxu0 %v1631
        %1912 = vmatprep.subr.bf16.mxu0 %v1636
        %1913 = vmatpush1.bf16.msra.mxu0 %v1635
        %1914 = vmatprep.subr.bf16.mxu0 %v1640
        %1915 = vmatpush1.bf16.msra.mxu0 %v1639
        %1916 = vmatprep.mubr.bf16.mxu0 %v952
        %1917 = vmatmul.mubr.bf16.gmra.mrb[0].mxu0 %v951
        %v1918 = vpop.f32.mrb[0].mxu0
        %v1919 = vadd.f32 %v1806, %v1918
        %v1920 = vpop.f32.mrb[0].mxu0
        %v1921 = vadd.f32 %v1808, %v1920
        %v1922 = vpop.f32.mrb[0].mxu0
        %v1923 = vadd.f32 %v1810, %v1922
        %v1924 = vpop.f32.mrb[0].mxu0
        %v1925 = vadd.f32 %v1812, %v1924
        %1926 = vmatprep.mubr.bf16.mxu0 %v956
        %1927 = vmatmul.mubr.bf16.gmra.mrb[0].mxu0 %v955
        %v1928 = vpop.f32.mrb[0].mxu0
        %v1929 = vadd.f32 %v1816, %v1928
        %v1930 = vpop.f32.mrb[0].mxu0
        %v1931 = vadd.f32 %v1818, %v1930
        %v1932 = vpop.f32.mrb[0].mxu0
        %v1933 = vadd.f32 %v1820, %v1932
        %v1934 = vpop.f32.mrb[0].mxu0
        %v1935 = vadd.f32 %v1822, %v1934
        %1936 = vmatprep.mubr.bf16.mxu0 %v960
        %1937 = vmatmul.mubr.bf16.gmra.mrb[0].mxu0 %v959
        %v1938 = vpop.f32.mrb[0].mxu0
        %v1939 = vadd.f32 %v1826, %v1938
        %v1940 = vpop.f32.mrb[0].mxu0
        %v1941 = vadd.f32 %v1828, %v1940
        %v1942 = vpop.f32.mrb[0].mxu0
        %v1943 = vadd.f32 %v1830, %v1942
        %v1944 = vpop.f32.mrb[0].mxu0
        %v1945 = vadd.f32 %v1832, %v1944
        %1946 = vmatprep.mubr.bf16.mxu0 %v964
        %1947 = vmatmul.mubr.bf16.gmra.mrb[0].mxu0 %v963
        %v1948 = vpop.f32.mrb[0].mxu0
        %v1949 = vadd.f32 %v1836, %v1948
        %v1950 = vpop.f32.mrb[0].mxu0
        %v1951 = vadd.f32 %v1838, %v1950
        %v1952 = vpop.f32.mrb[0].mxu0
        %v1953 = vadd.f32 %v1840, %v1952
        %v1954 = vpop.f32.mrb[0].mxu0
        %v1955 = vadd.f32 %v1842, %v1954
        %1956 = vmatprep.mubr.bf16.mxu0 %v968
        %1957 = vmatmul.mubr.bf16.gmra.mrb[0].mxu0 %v967
        %v1958 = vpop.f32.mrb[0].mxu0
        %v1959 = vadd.f32 %v1846, %v1958
        %v1960 = vpop.f32.mrb[0].mxu0
        %v1961 = vadd.f32 %v1848, %v1960
        %v1962 = vpop.f32.mrb[0].mxu0
        %v1963 = vadd.f32 %v1850, %v1962
        %v1964 = vpop.f32.mrb[0].mxu0
        %v1965 = vadd.f32 %v1852, %v1964
        %1966 = vmatprep.mubr.bf16.mxu0 %v972
        %1967 = vmatmul.mubr.bf16.gmra.mrb[0].mxu0 %v971
        %v1968 = vpop.f32.mrb[0].mxu0
        %v1969 = vadd.f32 %v1856, %v1968
        %v1970 = vpop.f32.mrb[0].mxu0
        %v1971 = vadd.f32 %v1858, %v1970
        %v1972 = vpop.f32.mrb[0].mxu0
        %v1973 = vadd.f32 %v1860, %v1972
        %v1974 = vpop.f32.mrb[0].mxu0
        %v1975 = vadd.f32 %v1862, %v1974
        %1976 = vmatprep.mubr.bf16.mxu0 %v976
        %1977 = vmatmul.mubr.bf16.gmra.mrb[0].mxu0 %v975
        %v1978 = vpop.f32.mrb[0].mxu0
        %v1979 = vadd.f32 %v1866, %v1978
        %v1980 = vpop.f32.mrb[0].mxu0
        %v1981 = vadd.f32 %v1868, %v1980
        %v1982 = vpop.f32.mrb[0].mxu0
        %v1983 = vadd.f32 %v1870, %v1982
        %v1984 = vpop.f32.mrb[0].mxu0
        %v1985 = vadd.f32 %v1872, %v1984
        %1986 = vmatprep.mubr.bf16.mxu0 %v980
        %1987 = vmatmul.mubr.bf16.gmra.mrb[0].mxu0 %v979
        %v1988 = vpop.f32.mrb[0].mxu0
        %v1989 = vadd.f32 %v1876, %v1988
        %v1990 = vpop.f32.mrb[0].mxu0
        %v1991 = vadd.f32 %v1878, %v1990
        %v1992 = vpop.f32.mrb[0].mxu0
        %v1993 = vadd.f32 %v1880, %v1992
        %v1994 = vpop.f32.mrb[0].mxu0
        %v1995 = vadd.f32 %v1882, %v1994
        %1996 = vdwg.mxu0
        %1997 = vmatprep.subr.bf16.mxu0 %v1518
        %1998 = vmatpush1.bf16.msra.mxu0 %v1517
        %1999 = vmatprep.subr.bf16.mxu0 %v1522
        %2000 = vmatpush1.bf16.msra.mxu0 %v1521
        %2001 = vmatprep.subr.bf16.mxu0 %v1526
        %2002 = vmatpush1.bf16.msra.mxu0 %v1525
        %2003 = vmatprep.subr.bf16.mxu0 %v1530
        %2004 = vmatpush1.bf16.msra.mxu0 %v1529
        %2005 = vmatprep.subr.bf16.mxu0 %v1534
        %2006 = vmatpush1.bf16.msra.mxu0 %v1533
        %2007 = vmatprep.subr.bf16.mxu0 %v1538
        %2008 = vmatpush1.bf16.msra.mxu0 %v1537
        %2009 = vmatprep.subr.bf16.mxu0 %v1542
        %2010 = vmatpush1.bf16.msra.mxu0 %v1541
        %2011 = vmatprep.subr.bf16.mxu0 %v1546
        %2012 = vmatpush1.bf16.msra.mxu0 %v1545
        %2013 = vmatprep.subr.bf16.mxu0 %v1550
        %2014 = vmatpush1.bf16.msra.mxu0 %v1549
        %2015 = vmatprep.subr.bf16.mxu0 %v1554
        %2016 = vmatpush1.bf16.msra.mxu0 %v1553
        %2017 = vmatprep.subr.bf16.mxu0 %v1558
        %2018 = vmatpush1.bf16.msra.mxu0 %v1557
        %2019 = vmatprep.subr.bf16.mxu0 %v1562
        %2020 = vmatpush1.bf16.msra.mxu0 %v1561
        %2021 = vmatprep.subr.bf16.mxu0 %v1566
        %2022 = vmatpush1.bf16.msra.mxu0 %v1565
        %2023 = vmatprep.subr.bf16.mxu0 %v1570
        %2024 = vmatpush1.bf16.msra.mxu0 %v1569
        %2025 = vmatprep.subr.bf16.mxu0 %v1574
        %2026 = vmatpush1.bf16.msra.mxu0 %v1573
        %2027 = vmatprep.subr.bf16.mxu0 %v1578
        %2028 = vmatpush1.bf16.msra.mxu0 %v1577
        %2029 = vmatprep.mubr.bf16.mxu0 %v950
        %2030 = vmatmul.mubr.bf16.gmra.mrb[0].mxu0 %v949
        %v2031 = vpop.f32.mrb[0].mxu0
        %v2032 = vadd.f32 %v1122, %v2031
        %v2033 = vpop.f32.mrb[0].mxu0
        %v2034 = vadd.f32 %v1126, %v2033
        %v2035 = vpop.f32.mrb[0].mxu0
        %v2036 = vadd.f32 %v1122, %v2035
        %v2037 = vpop.f32.mrb[0].mxu0
        %v2038 = vadd.f32 %v1126, %v2037
        %2039 = vmatprep.mubr.bf16.mxu0 %v954
        %2040 = vmatmul.mubr.bf16.gmra.mrb[0].mxu0 %v953
        %v2041 = vpop.f32.mrb[0].mxu0
        %v2042 = vadd.f32 %v1122, %v2041
        %v2043 = vpop.f32.mrb[0].mxu0
        %v2044 = vadd.f32 %v1126, %v2043
        %v2045 = vpop.f32.mrb[0].mxu0
        %v2046 = vadd.f32 %v1122, %v2045
        %v2047 = vpop.f32.mrb[0].mxu0
        %v2048 = vadd.f32 %v1126, %v2047
        %2049 = vmatprep.mubr.bf16.mxu0 %v958
        %2050 = vmatmul.mubr.bf16.gmra.mrb[0].mxu0 %v957
        %v2051 = vpop.f32.mrb[0].mxu0
        %v2052 = vadd.f32 %v1122, %v2051
        %v2053 = vpop.f32.mrb[0].mxu0
        %v2054 = vadd.f32 %v1126, %v2053
        %v2055 = vpop.f32.mrb[0].mxu0
        %v2056 = vadd.f32 %v1122, %v2055
        %v2057 = vpop.f32.mrb[0].mxu0
        %v2058 = vadd.f32 %v1126, %v2057
        %2059 = vmatprep.mubr.bf16.mxu0 %v962
        %2060 = vmatmul.mubr.bf16.gmra.mrb[0].mxu0 %v961
        %v2061 = vpop.f32.mrb[0].mxu0
        %v2062 = vadd.f32 %v1122, %v2061
        %v2063 = vpop.f32.mrb[0].mxu0
        %v2064 = vadd.f32 %v1126, %v2063
        %v2065 = vpop.f32.mrb[0].mxu0
        %v2066 = vadd.f32 %v1122, %v2065
        %v2067 = vpop.f32.mrb[0].mxu0
        %v2068 = vadd.f32 %v1126, %v2067
        %2069 = vmatprep.mubr.bf16.mxu0 %v966
        %2070 = vmatmul.mubr.bf16.gmra.mrb[0].mxu0 %v965
        %v2071 = vpop.f32.mrb[0].mxu0
        %v2072 = vadd.f32 %v1122, %v2071
        %v2073 = vpop.f32.mrb[0].mxu0
        %v2074 = vadd.f32 %v1126, %v2073
        %v2075 = vpop.f32.mrb[0].mxu0
        %v2076 = vadd.f32 %v1122, %v2075
        %v2077 = vpop.f32.mrb[0].mxu0
        %v2078 = vadd.f32 %v1126, %v2077
        %2079 = vmatprep.mubr.bf16.mxu0 %v970
        %2080 = vmatmul.mubr.bf16.gmra.mrb[0].mxu0 %v969
        %v2081 = vpop.f32.mrb[0].mxu0
        %v2082 = vadd.f32 %v1122, %v2081
        %v2083 = vpop.f32.mrb[0].mxu0
        %v2084 = vadd.f32 %v1126, %v2083
        %v2085 = vpop.f32.mrb[0].mxu0
        %v2086 = vadd.f32 %v1122, %v2085
        %v2087 = vpop.f32.mrb[0].mxu0
        %v2088 = vadd.f32 %v1126, %v2087
        %2089 = vmatprep.mubr.bf16.mxu0 %v974
        %2090 = vmatmul.mubr.bf16.gmra.mrb[0].mxu0 %v973
        %v2091 = vpop.f32.mrb[0].mxu0
        %v2092 = vadd.f32 %v1122, %v2091
        %v2093 = vpop.f32.mrb[0].mxu0
        %v2094 = vadd.f32 %v1126, %v2093
        %v2095 = vpop.f32.mrb[0].mxu0
        %v2096 = vadd.f32 %v1122, %v2095
        %v2097 = vpop.f32.mrb[0].mxu0
        %v2098 = vadd.f32 %v1126, %v2097
        %2099 = vmatprep.mubr.bf16.mxu0 %v978
        %2100 = vmatmul.mubr.bf16.gmra.mrb[0].mxu0 %v977
        %v2101 = vpop.f32.mrb[0].mxu0
        %v2102 = vadd.f32 %v1122, %v2101
        %v2103 = vpop.f32.mrb[0].mxu0
        %v2104 = vadd.f32 %v1126, %v2103
        %v2105 = vpop.f32.mrb[0].mxu0
        %v2106 = vadd.f32 %v1122, %v2105
        %v2107 = vpop.f32.mrb[0].mxu0
        %v2108 = vadd.f32 %v1126, %v2107
        %2109 = vdwg.mxu0
        %2110 = vmatprep.subr.bf16.mxu0 %v1582
        %2111 = vmatpush1.bf16.msra.mxu0 %v1581
        %2112 = vmatprep.subr.bf16.mxu0 %v1586
        %2113 = vmatpush1.bf16.msra.mxu0 %v1585
        %2114 = vmatprep.subr.bf16.mxu0 %v1590
        %2115 = vmatpush1.bf16.msra.mxu0 %v1589
        %2116 = vmatprep.subr.bf16.mxu0 %v1594
        %2117 = vmatpush1.bf16.msra.mxu0 %v1593
        %2118 = vmatprep.subr.bf16.mxu0 %v1598
        %2119 = vmatpush1.bf16.msra.mxu0 %v1597
        %2120 = vmatprep.subr.bf16.mxu0 %v1602
        %2121 = vmatpush1.bf16.msra.mxu0 %v1601
        %2122 = vmatprep.subr.bf16.mxu0 %v1606
        %2123 = vmatpush1.bf16.msra.mxu0 %v1605
        %2124 = vmatprep.subr.bf16.mxu0 %v1610
        %2125 = vmatpush1.bf16.msra.mxu0 %v1609
        %2126 = vmatprep.subr.bf16.mxu0 %v1614
        %2127 = vmatpush1.bf16.msra.mxu0 %v1613
        %2128 = vmatprep.subr.bf16.mxu0 %v1618
        %2129 = vmatpush1.bf16.msra.mxu0 %v1617
        %2130 = vmatprep.subr.bf16.mxu0 %v1622
        %2131 = vmatpush1.bf16.msra.mxu0 %v1621
        %2132 = vmatprep.subr.bf16.mxu0 %v1626
        %2133 = vmatpush1.bf16.msra.mxu0 %v1625
        %2134 = vmatprep.subr.bf16.mxu0 %v1630
        %2135 = vmatpush1.bf16.msra.mxu0 %v1629
        %2136 = vmatprep.subr.bf16.mxu0 %v1634
        %2137 = vmatpush1.bf16.msra.mxu0 %v1633
        %2138 = vmatprep.subr.bf16.mxu0 %v1638
        %2139 = vmatpush1.bf16.msra.mxu0 %v1637
        %2140 = vmatprep.subr.bf16.mxu0 %v1642
        %2141 = vmatpush1.bf16.msra.mxu0 %v1641
        %2142 = vmatprep.mubr.bf16.mxu0 %v952
        %2143 = vmatmul.mubr.bf16.gmra.mrb[0].mxu0 %v951
        %v2144 = vpop.f32.mrb[0].mxu0
        %v2145 = vadd.f32 %v2032, %v2144
        %v2146 = vpop.f32.mrb[0].mxu0
        %v2147 = vadd.f32 %v2034, %v2146
        %v2148 = vpop.f32.mrb[0].mxu0
        %v2149 = vadd.f32 %v2036, %v2148
        %v2150 = vpop.f32.mrb[0].mxu0
        %v2151 = vadd.f32 %v2038, %v2150
        %2152 = vmatprep.mubr.bf16.mxu0 %v956
        %2153 = vmatmul.mubr.bf16.gmra.mrb[0].mxu0 %v955
        %v2154 = vpop.f32.mrb[0].mxu0
        %v2155 = vadd.f32 %v2042, %v2154
        %v2156 = vpop.f32.mrb[0].mxu0
        %v2157 = vadd.f32 %v2044, %v2156
        %v2158 = vpop.f32.mrb[0].mxu0
        %v2159 = vadd.f32 %v2046, %v2158
        %v2160 = vpop.f32.mrb[0].mxu0
        %v2161 = vadd.f32 %v2048, %v2160
        %2162 = vmatprep.mubr.bf16.mxu0 %v960
        %2163 = vmatmul.mubr.bf16.gmra.mrb[0].mxu0 %v959
        %v2164 = vpop.f32.mrb[0].mxu0
        %v2165 = vadd.f32 %v2052, %v2164
        %v2166 = vpop.f32.mrb[0].mxu0
        %v2167 = vadd.f32 %v2054, %v2166
        %v2168 = vpop.f32.mrb[0].mxu0
        %v2169 = vadd.f32 %v2056, %v2168
        %v2170 = vpop.f32.mrb[0].mxu0
        %v2171 = vadd.f32 %v2058, %v2170
        %2172 = vmatprep.mubr.bf16.mxu0 %v964
        %2173 = vmatmul.mubr.bf16.gmra.mrb[0].mxu0 %v963
        %v2174 = vpop.f32.mrb[0].mxu0
        %v2175 = vadd.f32 %v2062, %v2174
        %v2176 = vpop.f32.mrb[0].mxu0
        %v2177 = vadd.f32 %v2064, %v2176
        %v2178 = vpop.f32.mrb[0].mxu0
        %v2179 = vadd.f32 %v2066, %v2178
        %v2180 = vpop.f32.mrb[0].mxu0
        %v2181 = vadd.f32 %v2068, %v2180
        %2182 = vmatprep.mubr.bf16.mxu0 %v968
        %2183 = vmatmul.mubr.bf16.gmra.mrb[0].mxu0 %v967
        %v2184 = vpop.f32.mrb[0].mxu0
        %v2185 = vadd.f32 %v2072, %v2184
        %v2186 = vpop.f32.mrb[0].mxu0
        %v2187 = vadd.f32 %v2074, %v2186
        %v2188 = vpop.f32.mrb[0].mxu0
        %v2189 = vadd.f32 %v2076, %v2188
        %v2190 = vpop.f32.mrb[0].mxu0
        %v2191 = vadd.f32 %v2078, %v2190
        %2192 = vmatprep.mubr.bf16.mxu0 %v972
        %2193 = vmatmul.mubr.bf16.gmra.mrb[0].mxu0 %v971
        %v2194 = vpop.f32.mrb[0].mxu0
        %v2195 = vadd.f32 %v2082, %v2194
        %v2196 = vpop.f32.mrb[0].mxu0
        %v2197 = vadd.f32 %v2084, %v2196
        %v2198 = vpop.f32.mrb[0].mxu0
        %v2199 = vadd.f32 %v2086, %v2198
        %v2200 = vpop.f32.mrb[0].mxu0
        %v2201 = vadd.f32 %v2088, %v2200
        %2202 = vmatprep.mubr.bf16.mxu0 %v976
        %2203 = vmatmul.mubr.bf16.gmra.mrb[0].mxu0 %v975
        %v2204 = vpop.f32.mrb[0].mxu0
        %v2205 = vadd.f32 %v2092, %v2204
        %v2206 = vpop.f32.mrb[0].mxu0
        %v2207 = vadd.f32 %v2094, %v2206
        %v2208 = vpop.f32.mrb[0].mxu0
        %v2209 = vadd.f32 %v2096, %v2208
        %v2210 = vpop.f32.mrb[0].mxu0
        %v2211 = vadd.f32 %v2098, %v2210
        %2212 = vmatprep.mubr.bf16.mxu0 %v980
        %2213 = vmatmul.mubr.bf16.gmra.mrb[0].mxu0 %v979
        %v2214 = vpop.f32.mrb[0].mxu0
        %v2215 = vadd.f32 %v2102, %v2214
        %v2216 = vpop.f32.mrb[0].mxu0
        %v2217 = vadd.f32 %v2104, %v2216
        %v2218 = vpop.f32.mrb[0].mxu0
        %v2219 = vadd.f32 %v2106, %v2218
        %v2220 = vpop.f32.mrb[0].mxu0
        %v2221 = vadd.f32 %v2108, %v2220
        %2222 = vdwg.mxu0
        %v2223 = vmax.f32 %v1919, 0.0
        %v2224 = vmax.f32 %v1921, 0.0
        %v2225 = vmax.f32 %v2145, 0.0
        %v2226 = vmax.f32 %v2147, 0.0
        %v2227 = vmax.f32 %v1923, 0.0
        %v2228 = vmax.f32 %v1925, 0.0
        %v2229 = vmax.f32 %v2149, 0.0
        %v2230 = vmax.f32 %v2151, 0.0
        %v2231 = vmax.f32 %v1929, 0.0
        %v2232 = vmax.f32 %v1931, 0.0
        %v2233 = vmax.f32 %v2155, 0.0
        %v2234 = vmax.f32 %v2157, 0.0
        %v2235 = vmax.f32 %v1933, 0.0
        %v2236 = vmax.f32 %v1935, 0.0
        %v2237 = vmax.f32 %v2159, 0.0
        %v2238 = vmax.f32 %v2161, 0.0
        %v2239 = vmax.f32 %v1939, 0.0
        %v2240 = vmax.f32 %v1941, 0.0
        %v2241 = vmax.f32 %v2165, 0.0
        %v2242 = vmax.f32 %v2167, 0.0
        %v2243 = vmax.f32 %v1943, 0.0
        %v2244 = vmax.f32 %v1945, 0.0
        %v2245 = vmax.f32 %v2169, 0.0
        %v2246 = vmax.f32 %v2171, 0.0
        %v2247 = vmax.f32 %v1949, 0.0
        %v2248 = vmax.f32 %v1951, 0.0
        %v2249 = vmax.f32 %v2175, 0.0
        %v2250 = vmax.f32 %v2177, 0.0
        %v2251 = vmax.f32 %v1953, 0.0
        %v2252 = vmax.f32 %v1955, 0.0
        %v2253 = vmax.f32 %v2179, 0.0
        %v2254 = vmax.f32 %v2181, 0.0
        %v2255 = vmax.f32 %v1959, 0.0
        %v2256 = vmax.f32 %v1961, 0.0
        %v2257 = vmax.f32 %v2185, 0.0
        %v2258 = vmax.f32 %v2187, 0.0
        %v2259 = vmax.f32 %v1963, 0.0
        %v2260 = vmax.f32 %v1965, 0.0
        %v2261 = vmax.f32 %v2189, 0.0
        %v2262 = vmax.f32 %v2191, 0.0
        %v2263 = vmax.f32 %v1969, 0.0
        %v2264 = vmax.f32 %v1971, 0.0
        %v2265 = vmax.f32 %v2195, 0.0
        %v2266 = vmax.f32 %v2197, 0.0
        %v2267 = vmax.f32 %v1973, 0.0
        %v2268 = vmax.f32 %v1975, 0.0
        %v2269 = vmax.f32 %v2199, 0.0
        %v2270 = vmax.f32 %v2201, 0.0
        %v2271 = vmax.f32 %v1979, 0.0
        %v2272 = vmax.f32 %v1981, 0.0
        %v2273 = vmax.f32 %v2205, 0.0
        %v2274 = vmax.f32 %v2207, 0.0
        %v2275 = vmax.f32 %v1983, 0.0
        %v2276 = vmax.f32 %v1985, 0.0
        %v2277 = vmax.f32 %v2209, 0.0
        %v2278 = vmax.f32 %v2211, 0.0
        %v2279 = vmax.f32 %v1989, 0.0
        %v2280 = vmax.f32 %v1991, 0.0
        %v2281 = vmax.f32 %v2215, 0.0
        %v2282 = vmax.f32 %v2217, 0.0
        %v2283 = vmax.f32 %v1993, 0.0
        %v2284 = vmax.f32 %v1995, 0.0
        %v2285 = vmax.f32 %v2219, 0.0
        %v2286 = vmax.f32 %v2221, 0.0
        %v2287 = vpack.c.bf16 %v2227, %v2223
        %v2288 = vpack.c.bf16 %v2228, %v2224
        %v2289 = vpack.c.bf16 %v2229, %v2225
        %v2290 = vpack.c.bf16 %v2230, %v2226
        %v2291 = vpack.c.bf16 %v2235, %v2231
        %v2292 = vpack.c.bf16 %v2236, %v2232
        %v2293 = vpack.c.bf16 %v2237, %v2233
        %v2294 = vpack.c.bf16 %v2238, %v2234
        %v2295 = vpack.c.bf16 %v2243, %v2239
        %v2296 = vpack.c.bf16 %v2244, %v2240
        %v2297 = vpack.c.bf16 %v2245, %v2241
        %v2298 = vpack.c.bf16 %v2246, %v2242
        %v2299 = vpack.c.bf16 %v2251, %v2247
        %v2300 = vpack.c.bf16 %v2252, %v2248
        %v2301 = vpack.c.bf16 %v2253, %v2249
        %v2302 = vpack.c.bf16 %v2254, %v2250
        %v2303 = vpack.c.bf16 %v2259, %v2255
        %v2304 = vpack.c.bf16 %v2260, %v2256
        %v2305 = vpack.c.bf16 %v2261, %v2257
        %v2306 = vpack.c.bf16 %v2262, %v2258
        %v2307 = vpack.c.bf16 %v2267, %v2263
        %v2308 = vpack.c.bf16 %v2268, %v2264
        %v2309 = vpack.c.bf16 %v2269, %v2265
        %v2310 = vpack.c.bf16 %v2270, %v2266
        %v2311 = vpack.c.bf16 %v2275, %v2271
        %v2312 = vpack.c.bf16 %v2276, %v2272
        %v2313 = vpack.c.bf16 %v2277, %v2273
        %v2314 = vpack.c.bf16 %v2278, %v2274
        %v2315 = vpack.c.bf16 %v2283, %v2279
        %v2316 = vpack.c.bf16 %v2284, %v2280
        %v2317 = vpack.c.bf16 %v2285, %v2281
        %v2318 = vpack.c.bf16 %v2286, %v2282
        %v2319 = vld [vmem:[#allocation11] sm:$0xf]
        %v2320 = vld [vmem:[#allocation11 + $0x4] sm:$0xf]
        %v2321 = vld [vmem:[#allocation11 + $0x8] sm:$0xf]
        %v2322 = vld [vmem:[#allocation11 + $0xc] sm:$0xf]
        %v2323 = vld [vmem:[#allocation11 + $0x10] sm:$0xf]
        %v2324 = vld [vmem:[#allocation11 + $0x14] sm:$0xf]
        %v2325 = vld [vmem:[#allocation11 + $0x18] sm:$0xf]
        %v2326 = vld [vmem:[#allocation11 + $0x1c] sm:$0xf]
        %v2327 = vld [vmem:[#allocation11 + $0x20] sm:$0xf]
        %v2328 = vld [vmem:[#allocation11 + $0x24] sm:$0xf]
        %v2329 = vld [vmem:[#allocation11 + $0x28] sm:$0xf]
        %v2330 = vld [vmem:[#allocation11 + $0x2c] sm:$0xf]
        %v2331 = vld [vmem:[#allocation11 + $0x30] sm:$0xf]
        %v2332 = vld [vmem:[#allocation11 + $0x34] sm:$0xf]
        %v2333 = vld [vmem:[#allocation11 + $0x38] sm:$0xf]
        %v2334 = vld [vmem:[#allocation11 + $0x3c] sm:$0xf]
        %v2335 = vld [vmem:[#allocation11 + $0x40] sm:$0xf]
        %v2336 = vld [vmem:[#allocation11 + $0x44] sm:$0xf]
        %v2337 = vld [vmem:[#allocation11 + $0x48] sm:$0xf]
        %v2338 = vld [vmem:[#allocation11 + $0x4c] sm:$0xf]
        %v2339 = vld [vmem:[#allocation11 + $0x50] sm:$0xf]
        %v2340 = vld [vmem:[#allocation11 + $0x54] sm:$0xf]
        %v2341 = vld [vmem:[#allocation11 + $0x58] sm:$0xf]
        %v2342 = vld [vmem:[#allocation11 + $0x5c] sm:$0xf]
        %v2343 = vld [vmem:[#allocation11 + $0x60] sm:$0xf]
        %v2344 = vld [vmem:[#allocation11 + $0x64] sm:$0xf]
        %v2345 = vld [vmem:[#allocation11 + $0x68] sm:$0xf]
        %v2346 = vld [vmem:[#allocation11 + $0x6c] sm:$0xf]
        %v2347 = vld [vmem:[#allocation11 + $0x70] sm:$0xf]
        %v2348 = vld [vmem:[#allocation11 + $0x74] sm:$0xf]
        %v2349 = vld [vmem:[#allocation11 + $0x78] sm:$0xf]
        %v2350 = vld [vmem:[#allocation11 + $0x7c] sm:$0xf]
        %v2351 = vld [vmem:[#allocation11 + $0x80] sm:$0xf]
        %v2352 = vld [vmem:[#allocation11 + $0x84] sm:$0xf]
        %v2353 = vld [vmem:[#allocation11 + $0x88] sm:$0xf]
        %v2354 = vld [vmem:[#allocation11 + $0x8c] sm:$0xf]
        %v2355 = vld [vmem:[#allocation11 + $0x90] sm:$0xf]
        %v2356 = vld [vmem:[#allocation11 + $0x94] sm:$0xf]
        %v2357 = vld [vmem:[#allocation11 + $0x98] sm:$0xf]
        %v2358 = vld [vmem:[#allocation11 + $0x9c] sm:$0xf]
        %v2359 = vld [vmem:[#allocation11 + $0xa0] sm:$0xf]
        %v2360 = vld [vmem:[#allocation11 + $0xa4] sm:$0xf]
        %v2361 = vld [vmem:[#allocation11 + $0xa8] sm:$0xf]
        %v2362 = vld [vmem:[#allocation11 + $0xac] sm:$0xf]
        %v2363 = vld [vmem:[#allocation11 + $0xb0] sm:$0xf]
        %v2364 = vld [vmem:[#allocation11 + $0xb4] sm:$0xf]
        %v2365 = vld [vmem:[#allocation11 + $0xb8] sm:$0xf]
        %v2366 = vld [vmem:[#allocation11 + $0xbc] sm:$0xf]
        %v2367 = vld [vmem:[#allocation11 + $0xc0] sm:$0xf]
        %v2368 = vld [vmem:[#allocation11 + $0xc4] sm:$0xf]
        %v2369 = vld [vmem:[#allocation11 + $0xc8] sm:$0xf]
        %v2370 = vld [vmem:[#allocation11 + $0xcc] sm:$0xf]
        %v2371 = vld [vmem:[#allocation11 + $0xd0] sm:$0xf]
        %v2372 = vld [vmem:[#allocation11 + $0xd4] sm:$0xf]
        %v2373 = vld [vmem:[#allocation11 + $0xd8] sm:$0xf]
        %v2374 = vld [vmem:[#allocation11 + $0xdc] sm:$0xf]
        %v2375 = vld [vmem:[#allocation11 + $0xe0] sm:$0xf]
        %v2376 = vld [vmem:[#allocation11 + $0xe4] sm:$0xf]
        %v2377 = vld [vmem:[#allocation11 + $0xe8] sm:$0xf]
        %v2378 = vld [vmem:[#allocation11 + $0xec] sm:$0xf]
        %v2379 = vld [vmem:[#allocation11 + $0xf0] sm:$0xf]
        %v2380 = vld [vmem:[#allocation11 + $0xf4] sm:$0xf]
        %v2381 = vld [vmem:[#allocation11 + $0xf8] sm:$0xf]
        %v2382 = vld [vmem:[#allocation11 + $0xfc] sm:$0xf]
        %v2383 = vld [vmem:[#allocation13] sm:$0x1]
        %v2385 = vlaneseq
        %v2386 = vshrl.u32 %v2385, 7
        %v2387 = vsub.s32 0, %v2386
        %v2388 = vrot.slane %v2383, %v2387
        %v2454 = vunpack.c.l.b16 %v2319
        %v2455 = vunpack.c.l.b16 %v2320
        %v2456 = vunpack.c.l.b16 %v2321
        %v2457 = vunpack.c.l.b16 %v2322
        %v2458 = vunpack.c.l.b16 %v2323
        %v2459 = vunpack.c.l.b16 %v2324
        %v2460 = vunpack.c.l.b16 %v2325
        %v2461 = vunpack.c.l.b16 %v2326
        %v2462 = vunpack.c.l.b16 %v2327
        %v2463 = vunpack.c.l.b16 %v2328
        %v2464 = vunpack.c.l.b16 %v2329
        %v2465 = vunpack.c.l.b16 %v2330
        %v2466 = vunpack.c.l.b16 %v2331
        %v2467 = vunpack.c.l.b16 %v2332
        %v2468 = vunpack.c.l.b16 %v2333
        %v2469 = vunpack.c.l.b16 %v2334
        %v2470 = vunpack.c.l.b16 %v2335
        %v2471 = vunpack.c.l.b16 %v2336
        %v2472 = vunpack.c.l.b16 %v2337
        %v2473 = vunpack.c.l.b16 %v2338
        %v2474 = vunpack.c.l.b16 %v2339
        %v2475 = vunpack.c.l.b16 %v2340
        %v2476 = vunpack.c.l.b16 %v2341
        %v2477 = vunpack.c.l.b16 %v2342
        %v2478 = vunpack.c.l.b16 %v2343
        %v2479 = vunpack.c.l.b16 %v2344
        %v2480 = vunpack.c.l.b16 %v2345
        %v2481 = vunpack.c.l.b16 %v2346
        %v2482 = vunpack.c.l.b16 %v2347
        %v2483 = vunpack.c.l.b16 %v2348
        %v2484 = vunpack.c.l.b16 %v2349
        %v2485 = vunpack.c.l.b16 %v2350
        %v2486 = vunpack.c.l.b16 %v2351
        %v2487 = vunpack.c.l.b16 %v2352
        %v2488 = vunpack.c.l.b16 %v2353
        %v2489 = vunpack.c.l.b16 %v2354
        %v2490 = vunpack.c.l.b16 %v2355
        %v2491 = vunpack.c.l.b16 %v2356
        %v2492 = vunpack.c.l.b16 %v2357
        %v2493 = vunpack.c.l.b16 %v2358
        %v2494 = vunpack.c.l.b16 %v2359
        %v2495 = vunpack.c.l.b16 %v2360
        %v2496 = vunpack.c.l.b16 %v2361
        %v2497 = vunpack.c.l.b16 %v2362
        %v2498 = vunpack.c.l.b16 %v2363
        %v2499 = vunpack.c.l.b16 %v2364
        %v2500 = vunpack.c.l.b16 %v2365
        %v2501 = vunpack.c.l.b16 %v2366
        %v2502 = vunpack.c.l.b16 %v2367
        %v2503 = vunpack.c.l.b16 %v2368
        %v2504 = vunpack.c.l.b16 %v2369
        %v2505 = vunpack.c.l.b16 %v2370
        %v2506 = vunpack.c.l.b16 %v2371
        %v2507 = vunpack.c.l.b16 %v2372
        %v2508 = vunpack.c.l.b16 %v2373
        %v2509 = vunpack.c.l.b16 %v2374
        %v2510 = vunpack.c.l.b16 %v2375
        %v2511 = vunpack.c.l.b16 %v2376
        %v2512 = vunpack.c.l.b16 %v2377
        %v2513 = vunpack.c.l.b16 %v2378
        %v2514 = vunpack.c.l.b16 %v2379
        %v2515 = vunpack.c.l.b16 %v2380
        %v2516 = vunpack.c.l.b16 %v2381
        %v2517 = vunpack.c.l.b16 %v2382
        %v2518 = vpack.c.b16 %v2455, %v2454
        %v2519 = vpack.c.b16 %v2457, %v2456
        %v2520 = vpack.c.b16 %v2459, %v2458
        %v2521 = vpack.c.b16 %v2461, %v2460
        %v2522 = vpack.c.b16 %v2463, %v2462
        %v2523 = vpack.c.b16 %v2465, %v2464
        %v2524 = vpack.c.b16 %v2467, %v2466
        %v2525 = vpack.c.b16 %v2469, %v2468
        %v2526 = vpack.c.b16 %v2471, %v2470
        %v2527 = vpack.c.b16 %v2473, %v2472
        %v2528 = vpack.c.b16 %v2475, %v2474
        %v2529 = vpack.c.b16 %v2477, %v2476
        %v2530 = vpack.c.b16 %v2479, %v2478
        %v2531 = vpack.c.b16 %v2481, %v2480
        %v2532 = vpack.c.b16 %v2483, %v2482
        %v2533 = vpack.c.b16 %v2485, %v2484
        %v2534 = vpack.c.b16 %v2487, %v2486
        %v2535 = vpack.c.b16 %v2489, %v2488
        %v2536 = vpack.c.b16 %v2491, %v2490
        %v2537 = vpack.c.b16 %v2493, %v2492
        %v2538 = vpack.c.b16 %v2495, %v2494
        %v2539 = vpack.c.b16 %v2497, %v2496
        %v2540 = vpack.c.b16 %v2499, %v2498
        %v2541 = vpack.c.b16 %v2501, %v2500
        %v2542 = vpack.c.b16 %v2503, %v2502
        %v2543 = vpack.c.b16 %v2505, %v2504
        %v2544 = vpack.c.b16 %v2507, %v2506
        %v2545 = vpack.c.b16 %v2509, %v2508
        %v2546 = vpack.c.b16 %v2511, %v2510
        %v2547 = vpack.c.b16 %v2513, %v2512
        %v2548 = vpack.c.b16 %v2515, %v2514
        %v2549 = vpack.c.b16 %v2517, %v2516
        %2582 = vmatprep.subr.bf16.mxu0 0
        %2583 = vmatpush1.bf16.msra.mxu0 %v2518
        %2584 = vmatprep.subr.bf16.mxu0 0
        %2585 = vmatpush1.bf16.msra.mxu0 %v2519
        %2586 = vmatprep.subr.bf16.mxu0 0
        %2587 = vmatpush1.bf16.msra.mxu0 %v2520
        %2588 = vmatprep.subr.bf16.mxu0 0
        %2589 = vmatpush1.bf16.msra.mxu0 %v2521
        %2590 = vmatprep.subr.bf16.mxu0 0
        %2591 = vmatpush1.bf16.msra.mxu0 %v2522
        %2592 = vmatprep.subr.bf16.mxu0 0
        %2593 = vmatpush1.bf16.msra.mxu0 %v2523
        %2594 = vmatprep.subr.bf16.mxu0 0
        %2595 = vmatpush1.bf16.msra.mxu0 %v2524
        %2596 = vmatprep.subr.bf16.mxu0 0
        %2597 = vmatpush1.bf16.msra.mxu0 %v2525
        %2598 = vmatprep.subr.bf16.mxu0 0
        %2599 = vmatpush1.bf16.msra.mxu0 %v2526
        %2600 = vmatprep.subr.bf16.mxu0 0
        %2601 = vmatpush1.bf16.msra.mxu0 %v2527
        %2602 = vmatprep.subr.bf16.mxu0 0
        %2603 = vmatpush1.bf16.msra.mxu0 %v2528
        %2604 = vmatprep.subr.bf16.mxu0 0
        %2605 = vmatpush1.bf16.msra.mxu0 %v2529
        %2606 = vmatprep.subr.bf16.mxu0 0
        %2607 = vmatpush1.bf16.msra.mxu0 %v2530
        %2608 = vmatprep.subr.bf16.mxu0 0
        %2609 = vmatpush1.bf16.msra.mxu0 %v2531
        %2610 = vmatprep.subr.bf16.mxu0 0
        %2611 = vmatpush1.bf16.msra.mxu0 %v2532
        %2612 = vmatprep.subr.bf16.mxu0 0
        %2613 = vmatpush1.bf16.msra.mxu0 %v2533
        %2614 = vmatprep.mubr.bf16.mxu0 %v2288
        %2615 = vmatmul.mubr.bf16.gmra.mrb[0].mxu0 %v2287
        %v2616 = vpop.f32.mrb[0].mxu0
        %v2617 = vadd.f32 %v2388, %v2616
        %v2618 = vpop.f32.mrb[0].mxu0
        %v2619 = vpop.f32.mrb[0].mxu0
        %v2620 = vadd.f32 %v2388, %v2619
        %v2621 = vpop.f32.mrb[0].mxu0
        %2622 = vmatprep.mubr.bf16.mxu0 %v2292
        %2623 = vmatmul.mubr.bf16.gmra.mrb[0].mxu0 %v2291
        %v2624 = vpop.f32.mrb[0].mxu0
        %v2625 = vadd.f32 %v2388, %v2624
        %v2626 = vpop.f32.mrb[0].mxu0
        %v2627 = vpop.f32.mrb[0].mxu0
        %v2628 = vadd.f32 %v2388, %v2627
        %v2629 = vpop.f32.mrb[0].mxu0
        %2630 = vmatprep.mubr.bf16.mxu0 %v2296
        %2631 = vmatmul.mubr.bf16.gmra.mrb[0].mxu0 %v2295
        %v2632 = vpop.f32.mrb[0].mxu0
        %v2633 = vadd.f32 %v2388, %v2632
        %v2634 = vpop.f32.mrb[0].mxu0
        %v2635 = vpop.f32.mrb[0].mxu0
        %v2636 = vadd.f32 %v2388, %v2635
        %v2637 = vpop.f32.mrb[0].mxu0
        %2638 = vmatprep.mubr.bf16.mxu0 %v2300
        %2639 = vmatmul.mubr.bf16.gmra.mrb[0].mxu0 %v2299
        %v2640 = vpop.f32.mrb[0].mxu0
        %v2641 = vadd.f32 %v2388, %v2640
        %v2642 = vpop.f32.mrb[0].mxu0
        %v2643 = vpop.f32.mrb[0].mxu0
        %v2644 = vadd.f32 %v2388, %v2643
        %v2645 = vpop.f32.mrb[0].mxu0
        %2646 = vmatprep.mubr.bf16.mxu0 %v2304
        %2647 = vmatmul.mubr.bf16.gmra.mrb[0].mxu0 %v2303
        %v2648 = vpop.f32.mrb[0].mxu0
        %v2649 = vadd.f32 %v2388, %v2648
        %v2650 = vpop.f32.mrb[0].mxu0
        %v2651 = vpop.f32.mrb[0].mxu0
        %v2652 = vadd.f32 %v2388, %v2651
        %v2653 = vpop.f32.mrb[0].mxu0
        %2654 = vmatprep.mubr.bf16.mxu0 %v2308
        %2655 = vmatmul.mubr.bf16.gmra.mrb[0].mxu0 %v2307
        %v2656 = vpop.f32.mrb[0].mxu0
        %v2657 = vadd.f32 %v2388, %v2656
        %v2658 = vpop.f32.mrb[0].mxu0
        %v2659 = vpop.f32.mrb[0].mxu0
        %v2660 = vadd.f32 %v2388, %v2659
        %v2661 = vpop.f32.mrb[0].mxu0
        %2662 = vmatprep.mubr.bf16.mxu0 %v2312
        %2663 = vmatmul.mubr.bf16.gmra.mrb[0].mxu0 %v2311
        %v2664 = vpop.f32.mrb[0].mxu0
        %v2665 = vadd.f32 %v2388, %v2664
        %v2666 = vpop.f32.mrb[0].mxu0
        %v2667 = vpop.f32.mrb[0].mxu0
        %v2668 = vadd.f32 %v2388, %v2667
        %v2669 = vpop.f32.mrb[0].mxu0
        %2670 = vmatprep.mubr.bf16.mxu0 %v2316
        %2671 = vmatmul.mubr.bf16.gmra.mrb[0].mxu0 %v2315
        %v2672 = vpop.f32.mrb[0].mxu0
        %v2673 = vadd.f32 %v2388, %v2672
        %v2674 = vpop.f32.mrb[0].mxu0
        %v2675 = vpop.f32.mrb[0].mxu0
        %v2676 = vadd.f32 %v2388, %v2675
        %v2677 = vpop.f32.mrb[0].mxu0
        %2678 = vdwg.mxu0
        %2679 = vmatprep.subr.bf16.mxu0 0
        %2680 = vmatpush1.bf16.msra.mxu0 %v2534
        %2681 = vmatprep.subr.bf16.mxu0 0
        %2682 = vmatpush1.bf16.msra.mxu0 %v2535
        %2683 = vmatprep.subr.bf16.mxu0 0
        %2684 = vmatpush1.bf16.msra.mxu0 %v2536
        %2685 = vmatprep.subr.bf16.mxu0 0
        %2686 = vmatpush1.bf16.msra.mxu0 %v2537
        %2687 = vmatprep.subr.bf16.mxu0 0
        %2688 = vmatpush1.bf16.msra.mxu0 %v2538
        %2689 = vmatprep.subr.bf16.mxu0 0
        %2690 = vmatpush1.bf16.msra.mxu0 %v2539
        %2691 = vmatprep.subr.bf16.mxu0 0
        %2692 = vmatpush1.bf16.msra.mxu0 %v2540
        %2693 = vmatprep.subr.bf16.mxu0 0
        %2694 = vmatpush1.bf16.msra.mxu0 %v2541
        %2695 = vmatprep.subr.bf16.mxu0 0
        %2696 = vmatpush1.bf16.msra.mxu0 %v2542
        %2697 = vmatprep.subr.bf16.mxu0 0
        %2698 = vmatpush1.bf16.msra.mxu0 %v2543
        %2699 = vmatprep.subr.bf16.mxu0 0
        %2700 = vmatpush1.bf16.msra.mxu0 %v2544
        %2701 = vmatprep.subr.bf16.mxu0 0
        %2702 = vmatpush1.bf16.msra.mxu0 %v2545
        %2703 = vmatprep.subr.bf16.mxu0 0
        %2704 = vmatpush1.bf16.msra.mxu0 %v2546
        %2705 = vmatprep.subr.bf16.mxu0 0
        %2706 = vmatpush1.bf16.msra.mxu0 %v2547
        %2707 = vmatprep.subr.bf16.mxu0 0
        %2708 = vmatpush1.bf16.msra.mxu0 %v2548
        %2709 = vmatprep.subr.bf16.mxu0 0
        %2710 = vmatpush1.bf16.msra.mxu0 %v2549
        %2711 = vmatprep.mubr.bf16.mxu0 %v2290
        %2712 = vmatmul.mubr.bf16.gmra.mrb[0].mxu0 %v2289
        %v2713 = vpop.f32.mrb[0].mxu0
        %v2714 = vadd.f32 %v2617, %v2713
        %v2715 = vpop.f32.mrb[0].mxu0
        %v2716 = vpop.f32.mrb[0].mxu0
        %v2717 = vadd.f32 %v2620, %v2716
        %v2718 = vpop.f32.mrb[0].mxu0
        %2719 = vmatprep.mubr.bf16.mxu0 %v2294
        %2720 = vmatmul.mubr.bf16.gmra.mrb[0].mxu0 %v2293
        %v2721 = vpop.f32.mrb[0].mxu0
        %v2722 = vadd.f32 %v2625, %v2721
        %v2723 = vpop.f32.mrb[0].mxu0
        %v2724 = vpop.f32.mrb[0].mxu0
        %v2725 = vadd.f32 %v2628, %v2724
        %v2726 = vpop.f32.mrb[0].mxu0
        %2727 = vmatprep.mubr.bf16.mxu0 %v2298
        %2728 = vmatmul.mubr.bf16.gmra.mrb[0].mxu0 %v2297
        %v2729 = vpop.f32.mrb[0].mxu0
        %v2730 = vadd.f32 %v2633, %v2729
        %v2731 = vpop.f32.mrb[0].mxu0
        %v2732 = vpop.f32.mrb[0].mxu0
        %v2733 = vadd.f32 %v2636, %v2732
        %v2734 = vpop.f32.mrb[0].mxu0
        %2735 = vmatprep.mubr.bf16.mxu0 %v2302
        %2736 = vmatmul.mubr.bf16.gmra.mrb[0].mxu0 %v2301
        %v2737 = vpop.f32.mrb[0].mxu0
        %v2738 = vadd.f32 %v2641, %v2737
        %v2739 = vpop.f32.mrb[0].mxu0
        %v2740 = vpop.f32.mrb[0].mxu0
        %v2741 = vadd.f32 %v2644, %v2740
        %v2742 = vpop.f32.mrb[0].mxu0
        %2743 = vmatprep.mubr.bf16.mxu0 %v2306
        %2744 = vmatmul.mubr.bf16.gmra.mrb[0].mxu0 %v2305
        %v2745 = vpop.f32.mrb[0].mxu0
        %v2746 = vadd.f32 %v2649, %v2745
        %v2747 = vpop.f32.mrb[0].mxu0
        %v2748 = vpop.f32.mrb[0].mxu0
        %v2749 = vadd.f32 %v2652, %v2748
        %v2750 = vpop.f32.mrb[0].mxu0
        %2751 = vmatprep.mubr.bf16.mxu0 %v2310
        %2752 = vmatmul.mubr.bf16.gmra.mrb[0].mxu0 %v2309
        %v2753 = vpop.f32.mrb[0].mxu0
        %v2754 = vadd.f32 %v2657, %v2753
        %v2755 = vpop.f32.mrb[0].mxu0
        %v2756 = vpop.f32.mrb[0].mxu0
        %v2757 = vadd.f32 %v2660, %v2756
        %v2758 = vpop.f32.mrb[0].mxu0
        %2759 = vmatprep.mubr.bf16.mxu0 %v2314
        %2760 = vmatmul.mubr.bf16.gmra.mrb[0].mxu0 %v2313
        %v2761 = vpop.f32.mrb[0].mxu0
        %v2762 = vadd.f32 %v2665, %v2761
        %v2763 = vpop.f32.mrb[0].mxu0
        %v2764 = vpop.f32.mrb[0].mxu0
        %v2765 = vadd.f32 %v2668, %v2764
        %v2766 = vpop.f32.mrb[0].mxu0
        %2767 = vmatprep.mubr.bf16.mxu0 %v2318
        %2768 = vmatmul.mubr.bf16.gmra.mrb[0].mxu0 %v2317
        %v2769 = vpop.f32.mrb[0].mxu0
        %v2770 = vadd.f32 %v2673, %v2769
        %v2771 = vpop.f32.mrb[0].mxu0
        %v2772 = vpop.f32.mrb[0].mxu0
        %v2773 = vadd.f32 %v2676, %v2772
        %v2774 = vpop.f32.mrb[0].mxu0
        %2775 = vdwg.mxu0
        %v2776 = vxor.u32 %v2714, 2147483648
        %v2777 = vxor.u32 %v2717, 2147483648
        %v2778 = vxor.u32 %v2722, 2147483648
        %v2779 = vxor.u32 %v2725, 2147483648
        %v2780 = vxor.u32 %v2730, 2147483648
        %v2781 = vxor.u32 %v2733, 2147483648
        %v2782 = vxor.u32 %v2738, 2147483648
        %v2783 = vxor.u32 %v2741, 2147483648
        %v2784 = vxor.u32 %v2746, 2147483648
        %v2785 = vxor.u32 %v2749, 2147483648
        %v2786 = vxor.u32 %v2754, 2147483648
        %v2787 = vxor.u32 %v2757, 2147483648
        %v2788 = vxor.u32 %v2762, 2147483648
        %v2789 = vxor.u32 %v2765, 2147483648
        %v2790 = vxor.u32 %v2770, 2147483648
        %v2791 = vxor.u32 %v2773, 2147483648
        %v2792 = vmul.f32 %v2776, 1.442695
        %v2793 = vpow.pop %v2792
        %v2794 = vmul.f32 %v2777, 1.442695
        %v2795 = vpow.pop %v2794
        %v2796 = vmul.f32 %v2778, 1.442695
        %v2797 = vpow.pop %v2796
        %v2798 = vmul.f32 %v2779, 1.442695
        %v2799 = vpow.pop %v2798
        %v2800 = vmul.f32 %v2780, 1.442695
        %v2801 = vpow.pop %v2800
        %v2802 = vmul.f32 %v2781, 1.442695
        %v2803 = vpow.pop %v2802
        %v2804 = vmul.f32 %v2782, 1.442695
        %v2805 = vpow.pop %v2804
        %v2806 = vmul.f32 %v2783, 1.442695
        %v2807 = vpow.pop %v2806
        %v2808 = vmul.f32 %v2784, 1.442695
        %v2809 = vpow.pop %v2808
        %v2810 = vmul.f32 %v2785, 1.442695
        %v2811 = vpow.pop %v2810
        %v2812 = vmul.f32 %v2786, 1.442695
        %v2813 = vpow.pop %v2812
        %v2814 = vmul.f32 %v2787, 1.442695
        %v2815 = vpow.pop %v2814
        %v2816 = vmul.f32 %v2788, 1.442695
        %v2817 = vpow.pop %v2816
        %v2818 = vmul.f32 %v2789, 1.442695
        %v2819 = vpow.pop %v2818
        %v2820 = vmul.f32 %v2790, 1.442695
        %v2821 = vpow.pop %v2820
        %v2822 = vmul.f32 %v2791, 1.442695
        %v2823 = vpow.pop %v2822
        %v2824 = vadd.f32 %v2793, 1.0
        %v2825 = vadd.f32 %v2795, 1.0
        %v2826 = vadd.f32 %v2797, 1.0
        %v2827 = vadd.f32 %v2799, 1.0
        %v2828 = vadd.f32 %v2801, 1.0
        %v2829 = vadd.f32 %v2803, 1.0
        %v2830 = vadd.f32 %v2805, 1.0
        %v2831 = vadd.f32 %v2807, 1.0
        %v2832 = vadd.f32 %v2809, 1.0
        %v2833 = vadd.f32 %v2811, 1.0
        %v2834 = vadd.f32 %v2813, 1.0
        %v2835 = vadd.f32 %v2815, 1.0
        %v2836 = vadd.f32 %v2817, 1.0
        %v2837 = vadd.f32 %v2819, 1.0
        %v2838 = vadd.f32 %v2821, 1.0
        %v2839 = vadd.f32 %v2823, 1.0
        %v2840 = vrcp.pop %v2824
        %v2841 = vmul.f32 1.0, %v2840
        %v2842 = vrcp.pop %v2825
        %v2843 = vmul.f32 1.0, %v2842
        %v2844 = vrcp.pop %v2826
        %v2845 = vmul.f32 1.0, %v2844
        %v2846 = vrcp.pop %v2827
        %v2847 = vmul.f32 1.0, %v2846
        %v2848 = vrcp.pop %v2828
        %v2849 = vmul.f32 1.0, %v2848
        %v2850 = vrcp.pop %v2829
        %v2851 = vmul.f32 1.0, %v2850
        %v2852 = vrcp.pop %v2830
        %v2853 = vmul.f32 1.0, %v2852
        %v2854 = vrcp.pop %v2831
        %v2855 = vmul.f32 1.0, %v2854
        %v2856 = vrcp.pop %v2832
        %v2857 = vmul.f32 1.0, %v2856
        %v2858 = vrcp.pop %v2833
        %v2859 = vmul.f32 1.0, %v2858
        %v2860 = vrcp.pop %v2834
        %v2861 = vmul.f32 1.0, %v2860
        %v2862 = vrcp.pop %v2835
        %v2863 = vmul.f32 1.0, %v2862
        %v2864 = vrcp.pop %v2836
        %v2865 = vmul.f32 1.0, %v2864
        %v2866 = vrcp.pop %v2837
        %v2867 = vmul.f32 1.0, %v2866
        %v2868 = vrcp.pop %v2838
        %v2869 = vmul.f32 1.0, %v2868
        %v2870 = vrcp.pop %v2839
        %v2871 = vmul.f32 1.0, %v2870
        %2872 = vst [vmem:[%s377] sm:$0xff] %v2841
        %2873 = vst [vmem:[%s377 + $0x8] sm:$0xff] %v2843
        %2874 = vst [vmem:[%s377 + $0x10] sm:$0xff] %v2845
        %2875 = vst [vmem:[%s377 + $0x18] sm:$0xff] %v2847
        %2876 = vst [vmem:[%s377 + $0x20] sm:$0xff] %v2849
        %2877 = vst [vmem:[%s377 + $0x28] sm:$0xff] %v2851
        %2878 = vst [vmem:[%s377 + $0x30] sm:$0xff] %v2853
        %2879 = vst [vmem:[%s377 + $0x38] sm:$0xff] %v2855
        %2880 = vst [vmem:[%s377 + $0x40] sm:$0xff] %v2857
        %2881 = vst [vmem:[%s377 + $0x48] sm:$0xff] %v2859
        %2882 = vst [vmem:[%s377 + $0x50] sm:$0xff] %v2861
        %2883 = vst [vmem:[%s377 + $0x58] sm:$0xff] %v2863
        %2884 = vst [vmem:[%s377 + $0x60] sm:$0xff] %v2865
        %2885 = vst [vmem:[%s377 + $0x68] sm:$0xff] %v2867
        %2886 = vst [vmem:[%s377 + $0x70] sm:$0xff] %v2869
        %2887 = vst [vmem:[%s377 + $0x78] sm:$0xff] %v2871
        %s2888 = sand.u32 %s187, 1
        %s2889 = scalar_lea.sflag [#allocation4], %s2888
        %s2890 = sand.u32 %s187, 1
        %s2891 = smul.addr %s2890, 128
        %s2892 = scalar_lea.vmem [#allocation14], %s2891
        // Predicated region
        $region77: #{tpu_custom_call.1} parent=47 // pred_check
          %p2893 = pneg %p197
        $region78: #{tpu_custom_call.1} parent=47 // pred_check_branch
          %2895 = sbr.rel (%p2893) target = $region80
        $region79: #{tpu_custom_call.1} parent=47 // pred_region
          %s2896 = smul.u32 16, %s27
          %s2898 = ssub.s32 2048, 2048
          %2899 = vsyncadd %s2889, %s2898
          %s2900 = smul.addr %s2896, 128
          %s2901 = scalar_lea.hbm %s7, %s2900
          %s2902 = sshll.u32 %s2892, 4
          %s2903 = int_to_ptr.vmem [resolvable:$true] %s2902
          %2908 = dma.vmem_to_hbm [thread:$0]  %s2903, 2048, %s2901, %s2889, 128, 128, 8
        $region80: #{tpu_custom_call.1} parent=47 // pred_fallthru
          _
      $region48: #{tpu_custom_call.1} parent=5 // pred_fallthru
        _
      %p2909 = scmp.le.s32.totalorder 2, %s22
      // Predicated region
      $region81: #{tpu_custom_call.1} parent=5 // pred_check
        %p2910 = pneg %p2909
      $region82: #{tpu_custom_call.1} parent=5 // pred_check_branch
        %2912 = sbr.rel (%p2910) target = $region84
      $region83: #{tpu_custom_call.1} parent=5 // pred_region
        %s2913 = ssub.s32 %s22, 2
        // Predicated region
        $region85: #{tpu_custom_call.1} parent=83 // pred_check
          %p2914 = pneg %p203
        $region86: #{tpu_custom_call.1} parent=83 // pred_check_branch
          %2916 = sbr.rel (%p2914) target = $region88
        $region87: #{tpu_custom_call.1} parent=83 // pred_region
          %s2917 = sand.u32 %s188, 1
          %s2918 = scalar_lea.sflag [#allocation4], %s2917
          %s2919 = sand.u32 %s188, 1
          %s2920 = smul.addr %s2919, 128
          %s2921 = scalar_lea.vmem [#allocation14], %s2920
          %2922 = dma.done %s2918, 2048
        $region88: #{tpu_custom_call.1} parent=83 // pred_fallthru
          _
      $region84: #{tpu_custom_call.1} parent=5 // pred_fallthru
        _
    $region6: #{tpu_custom_call.1} parent=1 // loop_footer
      %s26 = sadd.s32 1, %s22
    $region7: #{tpu_custom_call.1} parent=1 // loop_footer_branch
      %21 = sbr.rel target = $region3
    $region8: #{tpu_custom_call.1} parent=1 // loop_exit
      _
    %2923 = vsyncpa [#allocation3], 1
    %s2924 = scalar_lea.sflag [#allocation3], 1
    %2925 = vsyncpa %s2924, 1
    %2926 = vsyncpa [#allocation6], 1
    %2927 = vsyncpa [#allocation9], 1
    %2928 = vsyncpa [#allocation12], 1
    %2929 = vsyncpa [#allocation4], 1
    %s2930 = scalar_lea.sflag [#allocation4], 1
    %2931 = vsyncpa %s2930, 1

</llo_original>
